<compile_context>
chip_gen: v7x
topology: tpu7x:2x2x1
jax: 0.10.0
libtpu: 0.0.40
codegen_flags: <defaults>
</compile_context>

<pallas_src>
import jax
import jax.numpy as jnp
from jax.experimental import pallas as pl
from jax.experimental.pallas import tpu as pltpu

BN_EPS = 1e-5
_VMEM_LIMIT = 32 * 1024 * 1024  # explicit scoped-VMEM budget (safe on v5e/v6e/v7x)


# ----------------------------------------------------------------------------
# helpers
# ----------------------------------------------------------------------------
def _largest_divisor(n: int, cap: int) -> int:
    cap = max(1, min(cap, n))
    for d in range(cap, 0, -1):
        if n % d == 0:
            return d
    return 1


def _pick_hw_tile(hw: int, cap: int = 2048) -> int:
    """Lane tile over flattened H*W: must divide hw and be a multiple of 128
    (or be the full extent)."""
    if hw <= cap:
        return hw
    start = cap - (cap % 128)
    for t in range(start, 0, -128):
        if hw % t == 0:
            return t
    return hw


def bilinear_matrix(in_size: int, out_size: int) -> jnp.ndarray:
    """(out_size, in_size) interpolation matrix, align_corners=True semantics."""
    if out_size == 1:
        src = jnp.zeros((1,), jnp.float32)
    else:
        src = jnp.arange(out_size, dtype=jnp.float32) * (in_size - 1) / (out_size - 1)
    i0 = jnp.clip(jnp.floor(src).astype(jnp.int32), 0, in_size - 1)
    i1 = jnp.clip(i0 + 1, 0, in_size - 1)
    frac = src - i0.astype(jnp.float32)
    return (jax.nn.one_hot(i0, in_size, dtype=jnp.float32) * (1.0 - frac)[:, None]
            + jax.nn.one_hot(i1, in_size, dtype=jnp.float32) * frac[:, None])


# ----------------------------------------------------------------------------
# Kernel 1: 1x1 conv (channels contracted) + per-channel sum / sum-of-squares.
#   Layout: pixels (flattened H*W tile) on the LANE axis -> lane-dense I/O.
#   x_ref:   (1, C_in, T)      w_ref: (C_out, C_in)
#   y_ref:   (1, C_out, T)     raw conv output (BN/PReLU applied later, fused
#                              into the upsample kernel)
#   sum_ref: (1, C_out, 1)     grid-accumulated over the T axis (resident block)
#   sq_ref:  (1, C_out, 1)
# ----------------------------------------------------------------------------
def conv_stats_kernel(x_ref, w_ref, y_ref, sum_ref, sq_ref):
    t = pl.program_id(1)

    @pl.when(t == 0)
    def _():
        sum_ref[...] = jnp.zeros_like(sum_ref)
        sq_ref[...] = jnp.zeros_like(sq_ref)

    y = jnp.dot(w_ref[...], x_ref[0], preferred_element_type=jnp.float32)  # (C_out, T)
    y_ref[0] = y.astype(y_ref.dtype)
    sum_ref[0] += jnp.sum(y, axis=1, keepdims=True)                        # (C_out, 1)
    sq_ref[0] += jnp.sum(y * y, axis=1, keepdims=True)


# ----------------------------------------------------------------------------
# Kernel 2: fused BN-apply + PReLU + bilinear x2 upsample on a batch of planes.
#   y_ref:     (B, H, W)    raw conv output planes (plane = (n, c))
#   scale_ref: (B, 1, 1)    per-plane gamma * inv_std
#   shift_ref: (B, 1, 1)    per-plane beta - mean * gamma * inv_std
#   ah_ref:    (H2, H)      row-interpolation matrix
#   awt_ref:   (W, W2)      column-interpolation matrix (transposed)
#   a_ref:     (1,) SMEM    shared PReLU slope (scalar)
#   o_ref:     (B, H2, W2)
# ----------------------------------------------------------------------------
def bn_prelu_upsample_kernel(y_ref, scale_ref, shift_ref, ah_ref, awt_ref,
                             a_ref, o_ref):
    a = a_ref[0]                                                 # SMEM scalar
    z = y_ref[...] * scale_ref[...] + shift_ref[...]             # fused BN, (B,H,W)
    z = jnp.where(z >= 0, z, a * z)                              # PReLU (shared slope)

    ah = ah_ref[...]                                             # (H2, H)
    awt = awt_ref[...]                                           # (W, W2)
    for b in range(y_ref.shape[0]):                              # static plane batch
        tmp = jnp.dot(ah, z[b], preferred_element_type=jnp.float32)        # (H2, W)
        o_ref[b] = jnp.dot(tmp, awt,
                           preferred_element_type=jnp.float32).astype(o_ref.dtype)


# ----------------------------------------------------------------------------
# Glue
# ----------------------------------------------------------------------------
@jax.jit
def upsample_forward(x, w_conv, gamma, beta, prelu_a):
    """x: (N, C_in, H, W) float32 -> (N, C_out, 2H, 2W) float32."""
    N, C_in, H, W = x.shape
    C_out = w_conv.shape[0]
    H2, W2 = 2 * H, 2 * W
    HW = H * W
    P = N * C_out

    # ---- stage 1: 1x1 conv + BN statistics (NCHW kept, free reshape only) ---
    T = _pick_hw_tile(HW)
    n_t = HW // T
    x3 = x.reshape(N, C_in, HW)

    y3, sums, sqs = pl.pallas_call(
        conv_stats_kernel,
        out_shape=(
            jax.ShapeDtypeStruct((N, C_out, HW), jnp.float32),
            jax.ShapeDtypeStruct((N, C_out, 1), jnp.float32),
            jax.ShapeDtypeStruct((N, C_out, 1), jnp.float32),
        ),
        grid=(N, n_t),
        in_specs=[
            pl.BlockSpec((1, C_in, T), lambda n, t: (n, 0, t)),
            pl.BlockSpec((C_out, C_in), lambda n, t: (0, 0)),
        ],
        out_specs=(
            pl.BlockSpec((1, C_out, T), lambda n, t: (n, 0, t)),
            pl.BlockSpec((1, C_out, 1), lambda n, t: (n, 0, 0)),
            pl.BlockSpec((1, C_out, 1), lambda n, t: (n, 0, 0)),
        ),
        compiler_params=pltpu.CompilerParams(
            dimension_semantics=("parallel", "arbitrary"),
            vmem_limit_bytes=_VMEM_LIMIT),
    )(x3, w_conv)

    # ---- tiny (C_out,)-sized BN math + per-plane affine params (XLA) --------
    m_total = jnp.float32(N * HW)
    mean = jnp.sum(sums[:, :, 0], axis=0) / m_total
    var = jnp.sum(sqs[:, :, 0], axis=0) / m_total - mean * mean     # biased var
    inv_std = jax.lax.rsqrt(var + BN_EPS)
    scale = gamma * inv_std                                         # (C_out,)
    shift = beta - mean * scale                                     # (C_out,)
    plane_scale = jnp.tile(scale, (N,)).reshape(P, 1, 1)
    plane_shift = jnp.tile(shift, (N,)).reshape(P, 1, 1)

    # ---- stage 2: fused normalize + PReLU + bilinear x2 upsample ------------
    A_h = bilinear_matrix(H, H2)                                    # (H2, H)
    A_wT = jnp.transpose(bilinear_matrix(W, W2))                    # (W, W2)
    B = _largest_divisor(P, 8)                                      # planes / step
    y_planes = y3.reshape(P, H, W)                                  # free reshape
    a_smem = jnp.reshape(jnp.asarray(prelu_a, jnp.float32), (1,))

    out = pl.pallas_call(
        bn_prelu_upsample_kernel,
        out_shape=jax.ShapeDtypeStruct((P, H2, W2), jnp.float32),
        grid=(P // B,),
        in_specs=[
            pl.BlockSpec((B, H, W), lambda i: (i, 0, 0)),
            pl.BlockSpec((B, 1, 1), lambda i: (i, 0, 0)),
            pl.BlockSpec((B, 1, 1), lambda i: (i, 0, 0)),
            pl.BlockSpec((H2, H), lambda i: (0, 0)),
            pl.BlockSpec((W, W2), lambda i: (0, 0)),
            pl.BlockSpec(memory_space=pltpu.MemorySpace.SMEM),
        ],
        out_specs=pl.BlockSpec((B, H2, W2), lambda i: (i, 0, 0)),
        compiler_params=pltpu.CompilerParams(
            dimension_semantics=("parallel",),
            vmem_limit_bytes=_VMEM_LIMIT),
    )(y_planes, plane_scale, plane_shift, A_h, A_wT, a_smem)

    return out.reshape(N, C_out, H2, W2)


def reference_forward(x, w_conv, gamma, beta, prelu_a):
    """Pure-JAX reference with PyTorch-equivalent math (correctness check)."""
    y = jnp.einsum('oc,nchw->nohw', w_conv, x)
    mean = y.mean(axis=(0, 2, 3), keepdims=True)
    var = ((y - mean) ** 2).mean(axis=(0, 2, 3), keepdims=True)
    z = (y - mean) * jax.lax.rsqrt(var + BN_EPS)
    z = z * gamma[None, :, None, None] + beta[None, :, None, None]
    z = jnp.where(z >= 0, z, prelu_a * z)
    H, W = x.shape[2], x.shape[3]
    A_h = bilinear_matrix(H, 2 * H)
    A_w = bilinear_matrix(W, 2 * W)
    return jnp.einsum('Hh,nchw,Ww->ncHW', A_h, z, A_w)


if __name__ == "__main__":
    # Small shapes consistent with the module: UpSample(in_channels=4, out_channels=2)
    N, C_in, C_out, H, W = 2, 4, 2, 16, 16
    key = jax.random.PRNGKey(0)
    kx, kw = jax.random.split(key)

    x = jax.random.normal(kx, (N, C_in, H, W), dtype=jnp.float32)

    # PyTorch defaults: BN gamma=1 / beta=0, PReLU a=0.25; 1x1 conv weight squeezed.
    w_conv = (jax.random.normal(kw, (C_out, C_in), dtype=jnp.float32) * 0.1)
    gamma = jnp.ones((C_out,), jnp.float32)
    beta = jnp.zeros((C_out,), jnp.float32)
    prelu_a = jnp.float32(0.25)

    out = upsample_forward(x, w_conv, gamma, beta, prelu_a)
    out = jax.block_until_ready(out)

    ref = reference_forward(x, w_conv, gamma, beta, prelu_a)
    assert out.shape == (N, C_out, 2 * H, 2 * W), out.shape
    assert jnp.allclose(out, ref, rtol=1e-4, atol=1e-4), \
        float(jnp.max(jnp.abs(out - ref)))

    print("KERNEL_OK")
</pallas_src>

<mosaic_0001>
module attributes {stable_mosaic.version = 11 : i64} {
  func.func @conv_stats_kernel(%arg0: i32, %arg1: i32, %arg2: memref<1x4x256xf32, #tpu.memory_space<vmem>>, %arg3: memref<2x4xf32, #tpu.memory_space<vmem>>, %arg4: memref<1x2x256xf32, #tpu.memory_space<vmem>>, %arg5: memref<1x2x1xf32, #tpu.memory_space<vmem>>, %arg6: memref<1x2x1xf32, #tpu.memory_space<vmem>>) attributes {dimension_semantics = [#tpu.dimension_semantics<parallel>, #tpu.dimension_semantics<arbitrary>], iteration_bounds = array<i64: 2, 1>, scalar_prefetch = 0 : i64, scratch_operands = 0 : i64, tpu.core_type = #tpu.core_type<tc>, window_params = [{transform_indices = @transform_0, window_bounds = array<i64: 1, 4, 256>}, {pipeline_mode = #tpu.pipeline_mode<synchronous>, transform_indices = @transform_1, window_bounds = array<i64: 2, 4>}, {transform_indices = @transform_2, window_bounds = array<i64: 1, 2, 256>}, {transform_indices = @transform_3, window_bounds = array<i64: 1, 2, 1>}, {transform_indices = @transform_4, window_bounds = array<i64: 1, 2, 1>}]} {
    %c0_i32 = arith.constant 0 : i32
    %0 = arith.cmpi eq, %arg1, %c0_i32 : i32
    %1 = arith.extui %0 : i1 to i32
    %c0_i32_0 = arith.constant 0 : i32
    %2 = arith.cmpi ne, %1, %c0_i32_0 : i32
    scf.if %2 {
      %cst_22 = arith.constant 0.000000e+00 : f32
      %27 = vector.broadcast %cst_22 : f32 to vector<1x2x1xf32>
      %c0_23 = arith.constant 0 : index
      %c0_24 = arith.constant 0 : index
      %c0_25 = arith.constant 0 : index
      %28 = vector.load %arg5[%c0_23, %c0_24, %c0_25] : memref<1x2x1xf32, #tpu.memory_space<vmem>>, vector<1x2x1xf32>
      tpu.vector_store %arg5[%c0_23, %c0_24, %c0_25], %27 {strides = array<i32>} : memref<1x2x1xf32, #tpu.memory_space<vmem>>, vector<1x2x1xf32>,
      %cst_26 = arith.constant 0.000000e+00 : f32
      %29 = vector.broadcast %cst_26 : f32 to vector<1x2x1xf32>
      %c0_27 = arith.constant 0 : index
      %c0_28 = arith.constant 0 : index
      %c0_29 = arith.constant 0 : index
      %30 = vector.load %arg6[%c0_27, %c0_28, %c0_29] : memref<1x2x1xf32, #tpu.memory_space<vmem>>, vector<1x2x1xf32>
      tpu.vector_store %arg6[%c0_27, %c0_28, %c0_29], %29 {strides = array<i32>} : memref<1x2x1xf32, #tpu.memory_space<vmem>>, vector<1x2x1xf32>,
    } else {
    }
    %c0 = arith.constant 0 : index
    %c0_1 = arith.constant 0 : index
    %3 = vector.load %arg3[%c0, %c0_1] : memref<2x4xf32, #tpu.memory_space<vmem>>, vector<2x4xf32>
    %c0_2 = arith.constant 0 : index
    %c0_3 = arith.constant 0 : index
    %c0_4 = arith.constant 0 : index
    %4 = vector.load %arg2[%c0_2, %c0_3, %c0_4] : memref<1x4x256xf32, #tpu.memory_space<vmem>>, vector<1x4x256xf32>
    %5 = vector.shape_cast %4 : vector<1x4x256xf32> to vector<4x256xf32>
    %cst = arith.constant dense<0.000000e+00> : vector<2x256xf32>
    %6 = tpu.matmul %3, %5, %cst {dimension_numbers = #tpu.dot_dimension_numbers<[1], [0], [0], [1], [0, 0, 1, 1], [], []>} : vector<2x4xf32>, vector<4x256xf32>, vector<2x256xf32> -> vector<2x256xf32>
    %c0_5 = arith.constant 0 : index
    %c0_6 = arith.constant 0 : index
    %c0_7 = arith.constant 0 : index
    %7 = vector.load %arg4[%c0_5, %c0_6, %c0_7] : memref<1x2x256xf32, #tpu.memory_space<vmem>>, vector<1x2x256xf32>
    %8 = vector.shape_cast %7 : vector<1x2x256xf32> to vector<2x256xf32>
    %9 = vector.shape_cast %6 : vector<2x256xf32> to vector<1x2x256xf32>
    tpu.vector_store %arg4[%c0_5, %c0_6, %c0_7], %9 {strides = array<i32>} : memref<1x2x256xf32, #tpu.memory_space<vmem>>, vector<1x2x256xf32>,
    %c0_8 = arith.constant 0 : index
    %c0_9 = arith.constant 0 : index
    %c0_10 = arith.constant 0 : index
    %10 = vector.load %arg5[%c0_8, %c0_9, %c0_10] : memref<1x2x1xf32, #tpu.memory_space<vmem>>, vector<1x2x1xf32>
    %11 = vector.shape_cast %10 : vector<1x2x1xf32> to vector<2x1xf32>
    %cst_11 = arith.constant dense<0.000000e+00> : vector<2xf32>
    %12 = vector.multi_reduction <add>, %6, %cst_11 [1] : vector<2x256xf32> to vector<2xf32>
    %13 = vector.shape_cast %12 : vector<2xf32> to vector<2x1xf32>
    %14 = arith.addf %11, %13 : vector<2x1xf32>
    %c0_12 = arith.constant 0 : index
    %c0_13 = arith.constant 0 : index
    %c0_14 = arith.constant 0 : index
    %15 = vector.load %arg5[%c0_12, %c0_13, %c0_14] : memref<1x2x1xf32, #tpu.memory_space<vmem>>, vector<1x2x1xf32>
    %16 = vector.shape_cast %15 : vector<1x2x1xf32> to vector<2x1xf32>
    %17 = vector.shape_cast %14 : vector<2x1xf32> to vector<1x2x1xf32>
    tpu.vector_store %arg5[%c0_12, %c0_13, %c0_14], %17 {strides = array<i32>} : memref<1x2x1xf32, #tpu.memory_space<vmem>>, vector<1x2x1xf32>,
    %c0_15 = arith.constant 0 : index
    %c0_16 = arith.constant 0 : index
    %c0_17 = arith.constant 0 : index
    %18 = vector.load %arg6[%c0_15, %c0_16, %c0_17] : memref<1x2x1xf32, #tpu.memory_space<vmem>>, vector<1x2x1xf32>
    %19 = vector.shape_cast %18 : vector<1x2x1xf32> to vector<2x1xf32>
    %20 = arith.mulf %6, %6 : vector<2x256xf32>
    %cst_18 = arith.constant dense<0.000000e+00> : vector<2xf32>
    %21 = vector.multi_reduction <add>, %20, %cst_18 [1] : vector<2x256xf32> to vector<2xf32>
    %22 = vector.shape_cast %21 : vector<2xf32> to vector<2x1xf32>
    %23 = arith.addf %19, %22 : vector<2x1xf32>
    %c0_19 = arith.constant 0 : index
    %c0_20 = arith.constant 0 : index
    %c0_21 = arith.constant 0 : index
    %24 = vector.load %arg6[%c0_19, %c0_20, %c0_21] : memref<1x2x1xf32, #tpu.memory_space<vmem>>, vector<1x2x1xf32>
    %25 = vector.shape_cast %24 : vector<1x2x1xf32> to vector<2x1xf32>
    %26 = vector.shape_cast %23 : vector<2x1xf32> to vector<1x2x1xf32>
    tpu.vector_store %arg6[%c0_19, %c0_20, %c0_21], %26 {strides = array<i32>} : memref<1x2x1xf32, #tpu.memory_space<vmem>>, vector<1x2x1xf32>,
    return
  }
  func.func @transform_0(%arg0: i32, %arg1: i32) -> (i32, i32, i32) {
    %c0_i32 = arith.constant 0 : i32
    %c0_i32_0 = arith.constant 0 : i32
    return %arg0, %c0_i32, %arg1 : i32, i32, i32
  }
  func.func @transform_1(%arg0: i32, %arg1: i32) -> (i32, i32) {
    %c0_i32 = arith.constant 0 : i32
    %c0_i32_0 = arith.constant 0 : i32
    %c0_i32_1 = arith.constant 0 : i32
    return %c0_i32, %c0_i32_0 : i32, i32
  }
  func.func @transform_2(%arg0: i32, %arg1: i32) -> (i32, i32, i32) {
    %c0_i32 = arith.constant 0 : i32
    %c0_i32_0 = arith.constant 0 : i32
    return %arg0, %c0_i32, %arg1 : i32, i32, i32
  }
  func.func @transform_3(%arg0: i32, %arg1: i32) -> (i32, i32, i32) {
    %c0_i32 = arith.constant 0 : i32
    %c0_i32_0 = arith.constant 0 : i32
    %c0_i32_1 = arith.constant 0 : i32
    return %arg0, %c0_i32, %c0_i32_0 : i32, i32, i32
  }
  func.func @transform_4(%arg0: i32, %arg1: i32) -> (i32, i32, i32) {
    %c0_i32 = arith.constant 0 : i32
    %c0_i32_0 = arith.constant 0 : i32
    %c0_i32_1 = arith.constant 0 : i32
    return %arg0, %c0_i32, %c0_i32_0 : i32, i32, i32
  }
}

module attributes {stable_mosaic.version = 11 : i64} {
  func.func @bn_prelu_upsample_kernel(%arg0: i32, %arg1: memref<4x16x16xf32, #tpu.memory_space<vmem>>, %arg2: memref<4x1x1xf32, #tpu.memory_space<vmem>>, %arg3: memref<4x1x1xf32, #tpu.memory_space<vmem>>, %arg4: memref<32x16xf32, #tpu.memory_space<vmem>>, %arg5: memref<16x32xf32, #tpu.memory_space<vmem>>, %arg6: memref<1xf32, #tpu.memory_space<smem>>, %arg7: memref<4x32x32xf32, #tpu.memory_space<vmem>>) attributes {dimension_semantics = [#tpu.dimension_semantics<parallel>], iteration_bounds = array<i64: 1>, scalar_prefetch = 0 : i64, scratch_operands = 0 : i64, tpu.core_type = #tpu.core_type<tc>, window_params = [{transform_indices = @transform_0, window_bounds = array<i64: 4, 16, 16>}, {transform_indices = @transform_1, window_bounds = array<i64: 4, 1, 1>}, {transform_indices = @transform_2, window_bounds = array<i64: 4, 1, 1>}, {pipeline_mode = #tpu.pipeline_mode<synchronous>, transform_indices = @transform_3, window_bounds = array<i64: 32, 16>}, {pipeline_mode = #tpu.pipeline_mode<synchronous>, transform_indices = @transform_4, window_bounds = array<i64: 16, 32>}, {transform_indices = @transform_5, window_bounds = array<i64: 1>}, {transform_indices = @transform_6, window_bounds = array<i64: 4, 32, 32>}]} {
    %c0 = arith.constant 0 : index
    %0 = memref.load %arg6[%c0] : memref<1xf32, #tpu.memory_space<smem>>
    %c0_0 = arith.constant 0 : index
    %c0_1 = arith.constant 0 : index
    %c0_2 = arith.constant 0 : index
    %1 = vector.load %arg1[%c0_0, %c0_1, %c0_2] : memref<4x16x16xf32, #tpu.memory_space<vmem>>, vector<4x16x16xf32>
    %c0_3 = arith.constant 0 : index
    %c0_4 = arith.constant 0 : index
    %c0_5 = arith.constant 0 : index
    %2 = vector.load %arg2[%c0_3, %c0_4, %c0_5] : memref<4x1x1xf32, #tpu.memory_space<vmem>>, vector<4x1x1xf32>
    %3 = vector.broadcast %2 : vector<4x1x1xf32> to vector<4x16x16xf32>
    %4 = arith.mulf %1, %3 : vector<4x16x16xf32>
    %c0_6 = arith.constant 0 : index
    %c0_7 = arith.constant 0 : index
    %c0_8 = arith.constant 0 : index
    %5 = vector.load %arg3[%c0_6, %c0_7, %c0_8] : memref<4x1x1xf32, #tpu.memory_space<vmem>>, vector<4x1x1xf32>
    %6 = vector.broadcast %5 : vector<4x1x1xf32> to vector<4x16x16xf32>
    %7 = arith.addf %4, %6 : vector<4x16x16xf32>
    %cst = arith.constant 0.000000e+00 : f32
    %8 = vector.broadcast %cst : f32 to vector<4x16x16xf32>
    %9 = arith.cmpf oge, %7, %8 : vector<4x16x16xf32>
    %10 = vector.broadcast %0 : f32 to vector<4x16x16xf32>
    %11 = arith.mulf %10, %7 : vector<4x16x16xf32>
    %12 = arith.select %9, %7, %11 : vector<4x16x16xi1>, vector<4x16x16xf32>
    %c0_9 = arith.constant 0 : index
    %c0_10 = arith.constant 0 : index
    %13 = vector.load %arg4[%c0_9, %c0_10] : memref<32x16xf32, #tpu.memory_space<vmem>>, vector<32x16xf32>
    %c0_11 = arith.constant 0 : index
    %c0_12 = arith.constant 0 : index
    %14 = vector.load %arg5[%c0_11, %c0_12] : memref<16x32xf32, #tpu.memory_space<vmem>>, vector<16x32xf32>
    %15 = vector.extract_strided_slice %12 {offsets = [0, 0, 0], sizes = [1, 16, 16], strides = [1, 1, 1]} : vector<4x16x16xf32> to vector<1x16x16xf32>
    %16 = vector.shape_cast %15 : vector<1x16x16xf32> to vector<16x16xf32>
    %cst_13 = arith.constant dense<0.000000e+00> : vector<32x16xf32>
    %17 = tpu.matmul %13, %16, %cst_13 {dimension_numbers = #tpu.dot_dimension_numbers<[1], [0], [0], [1], [0, 0, 1, 1], [], []>} : vector<32x16xf32>, vector<16x16xf32>, vector<32x16xf32> -> vector<32x16xf32>
    %cst_14 = arith.constant dense<0.000000e+00> : vector<32x32xf32>
    %18 = tpu.matmul %17, %14, %cst_14 {dimension_numbers = #tpu.dot_dimension_numbers<[1], [0], [0], [1], [0, 0, 1, 1], [], []>} : vector<32x16xf32>, vector<16x32xf32>, vector<32x32xf32> -> vector<32x32xf32>
    %c0_15 = arith.constant 0 : index
    %c0_16 = arith.constant 0 : index
    %c0_17 = arith.constant 0 : index
    %19 = vector.load %arg7[%c0_15, %c0_16, %c0_17] : memref<4x32x32xf32, #tpu.memory_space<vmem>>, vector<1x32x32xf32>
    %20 = vector.shape_cast %19 : vector<1x32x32xf32> to vector<32x32xf32>
    %21 = vector.shape_cast %18 : vector<32x32xf32> to vector<1x32x32xf32>
    tpu.vector_store %arg7[%c0_15, %c0_16, %c0_17], %21 {strides = array<i32>} : memref<4x32x32xf32, #tpu.memory_space<vmem>>, vector<1x32x32xf32>,
    %22 = vector.extract_strided_slice %12 {offsets = [1, 0, 0], sizes = [1, 16, 16], strides = [1, 1, 1]} : vector<4x16x16xf32> to vector<1x16x16xf32>
    %23 = vector.shape_cast %22 : vector<1x16x16xf32> to vector<16x16xf32>
    %cst_18 = arith.constant dense<0.000000e+00> : vector<32x16xf32>
    %24 = tpu.matmul %13, %23, %cst_18 {dimension_numbers = #tpu.dot_dimension_numbers<[1], [0], [0], [1], [0, 0, 1, 1], [], []>} : vector<32x16xf32>, vector<16x16xf32>, vector<32x16xf32> -> vector<32x16xf32>
    %cst_19 = arith.constant dense<0.000000e+00> : vector<32x32xf32>
    %25 = tpu.matmul %24, %14, %cst_19 {dimension_numbers = #tpu.dot_dimension_numbers<[1], [0], [0], [1], [0, 0, 1, 1], [], []>} : vector<32x16xf32>, vector<16x32xf32>, vector<32x32xf32> -> vector<32x32xf32>
    %c1 = arith.constant 1 : index
    %c0_20 = arith.constant 0 : index
    %c0_21 = arith.constant 0 : index
    %26 = vector.load %arg7[%c1, %c0_20, %c0_21] : memref<4x32x32xf32, #tpu.memory_space<vmem>>, vector<1x32x32xf32>
    %27 = vector.shape_cast %26 : vector<1x32x32xf32> to vector<32x32xf32>
    %28 = vector.shape_cast %25 : vector<32x32xf32> to vector<1x32x32xf32>
    tpu.vector_store %arg7[%c1, %c0_20, %c0_21], %28 {strides = array<i32>} : memref<4x32x32xf32, #tpu.memory_space<vmem>>, vector<1x32x32xf32>,
    %29 = vector.extract_strided_slice %12 {offsets = [2, 0, 0], sizes = [1, 16, 16], strides = [1, 1, 1]} : vector<4x16x16xf32> to vector<1x16x16xf32>
    %30 = vector.shape_cast %29 : vector<1x16x16xf32> to vector<16x16xf32>
    %cst_22 = arith.constant dense<0.000000e+00> : vector<32x16xf32>
    %31 = tpu.matmul %13, %30, %cst_22 {dimension_numbers = #tpu.dot_dimension_numbers<[1], [0], [0], [1], [0, 0, 1, 1], [], []>} : vector<32x16xf32>, vector<16x16xf32>, vector<32x16xf32> -> vector<32x16xf32>
    %cst_23 = arith.constant dense<0.000000e+00> : vector<32x32xf32>
    %32 = tpu.matmul %31, %14, %cst_23 {dimension_numbers = #tpu.dot_dimension_numbers<[1], [0], [0], [1], [0, 0, 1, 1], [], []>} : vector<32x16xf32>, vector<16x32xf32>, vector<32x32xf32> -> vector<32x32xf32>
    %c2 = arith.constant 2 : index
    %c0_24 = arith.constant 0 : index
    %c0_25 = arith.constant 0 : index
    %33 = vector.load %arg7[%c2, %c0_24, %c0_25] : memref<4x32x32xf32, #tpu.memory_space<vmem>>, vector<1x32x32xf32>
    %34 = vector.shape_cast %33 : vector<1x32x32xf32> to vector<32x32xf32>
    %35 = vector.shape_cast %32 : vector<32x32xf32> to vector<1x32x32xf32>
    tpu.vector_store %arg7[%c2, %c0_24, %c0_25], %35 {strides = array<i32>} : memref<4x32x32xf32, #tpu.memory_space<vmem>>, vector<1x32x32xf32>,
    %36 = vector.extract_strided_slice %12 {offsets = [3, 0, 0], sizes = [1, 16, 16], strides = [1, 1, 1]} : vector<4x16x16xf32> to vector<1x16x16xf32>
    %37 = vector.shape_cast %36 : vector<1x16x16xf32> to vector<16x16xf32>
    %cst_26 = arith.constant dense<0.000000e+00> : vector<32x16xf32>
    %38 = tpu.matmul %13, %37, %cst_26 {dimension_numbers = #tpu.dot_dimension_numbers<[1], [0], [0], [1], [0, 0, 1, 1], [], []>} : vector<32x16xf32>, vector<16x16xf32>, vector<32x16xf32> -> vector<32x16xf32>
    %cst_27 = arith.constant dense<0.000000e+00> : vector<32x32xf32>
    %39 = tpu.matmul %38, %14, %cst_27 {dimension_numbers = #tpu.dot_dimension_numbers<[1], [0], [0], [1], [0, 0, 1, 1], [], []>} : vector<32x16xf32>, vector<16x32xf32>, vector<32x32xf32> -> vector<32x32xf32>
    %c3 = arith.constant 3 : index
    %c0_28 = arith.constant 0 : index
    %c0_29 = arith.constant 0 : index
    %40 = vector.load %arg7[%c3, %c0_28, %c0_29] : memref<4x32x32xf32, #tpu.memory_space<vmem>>, vector<1x32x32xf32>
    %41 = vector.shape_cast %40 : vector<1x32x32xf32> to vector<32x32xf32>
    %42 = vector.shape_cast %39 : vector<32x32xf32> to vector<1x32x32xf32>
    tpu.vector_store %arg7[%c3, %c0_28, %c0_29], %42 {strides = array<i32>} : memref<4x32x32xf32, #tpu.memory_space<vmem>>, vector<1x32x32xf32>,
    return
  }
  func.func @transform_0(%arg0: i32) -> (i32, i32, i32) {
    %c0_i32 = arith.constant 0 : i32
    %c0_i32_0 = arith.constant 0 : i32
    %c0_i32_1 = arith.constant 0 : i32
    return %arg0, %c0_i32, %c0_i32_0 : i32, i32, i32
  }
  func.func @transform_1(%arg0: i32) -> (i32, i32, i32) {
    %c0_i32 = arith.constant 0 : i32
    %c0_i32_0 = arith.constant 0 : i32
    %c0_i32_1 = arith.constant 0 : i32
    return %arg0, %c0_i32, %c0_i32_0 : i32, i32, i32
  }
  func.func @transform_2(%arg0: i32) -> (i32, i32, i32) {
    %c0_i32 = arith.constant 0 : i32
    %c0_i32_0 = arith.constant 0 : i32
    %c0_i32_1 = arith.constant 0 : i32
    return %arg0, %c0_i32, %c0_i32_0 : i32, i32, i32
  }
  func.func @transform_3(%arg0: i32) -> (i32, i32) {
    %c0_i32 = arith.constant 0 : i32
    %c0_i32_0 = arith.constant 0 : i32
    %c0_i32_1 = arith.constant 0 : i32
    return %c0_i32, %c0_i32_0 : i32, i32
  }
  func.func @transform_4(%arg0: i32) -> (i32, i32) {
    %c0_i32 = arith.constant 0 : i32
    %c0_i32_0 = arith.constant 0 : i32
    %c0_i32_1 = arith.constant 0 : i32
    return %c0_i32, %c0_i32_0 : i32, i32
  }
  func.func @transform_5(%arg0: i32) -> i32 {
    %c0_i32 = arith.constant 0 : i32
    %c0_i32_0 = arith.constant 0 : i32
    return %c0_i32 : i32
  }
  func.func @transform_6(%arg0: i32) -> (i32, i32, i32) {
    %c0_i32 = arith.constant 0 : i32
    %c0_i32_0 = arith.constant 0 : i32
    %c0_i32_1 = arith.constant 0 : i32
    return %arg0, %c0_i32, %c0_i32_0 : i32, i32, i32
  }
}

</mosaic_0001>

<llo_original>
// kernel: tile.18
$region0: #{tile.18}
  #allocation0 [shape = 's32[1]{0}', space=sflag, size = 0x4, scoped, tag = 'scoped memory for tile.18']
  %s0 = inlined_call_operand.vmem [shape: f32[2], index: 0, kind: input, shape index: {}]
  %s1 = inlined_call_operand.vmem [shape: f32[2,2], index: 1, kind: output, shape index: {}]
  // Predicated region
  $region2: #{tile.18} parent=0 // pred_check
    _
  $region3: #{tile.18} parent=0 // pred_check_branch
    %3 = sbr.rel (0) target = $region5
  $region4: #{tile.18} parent=0 // pred_region
    _
  $region5: #{tile.18} parent=0 // pred_fallthru
    _
  %v4 = vld [vmem:[%s0] ss:$0 sm:$0xff]
  %5 = vst [vmem:[%s1] sm:$0x3] %v4

// kernel: tile.1
$region0: #{tile.1}
  %s0 = inlined_call_operand.vmem [shape: f32[2,2], index: 0, kind: input, shape index: {}]
  %s1 = inlined_call_operand.vmem [shape: f32[4,1,1], index: 1, kind: output, shape index: {}]
  $region1: #{tile.1} parent=0
    #allocation0 [shape = 'u8[16384]{0}', space=vmem, size = 0x4000, scoped, tag = 'scoped mem for output reshape']
    #allocation1 [shape = 'u8[4096]{0}', space=vmem, size = 0x1000, scoped, tag = 'scoped mem for input reshape']
    %s3 = sshllo.u32 0, 2
    %v4 = vld [vmem:[%s0] sm:%s3]
    %5 = vst [vmem:[#allocation1] sm:%s3] %v4
    %v6 = vld [vmem:[#allocation1] sm:$0x3]
    %vm7 = vcmask 7168
    %8 = vst.msk [vmem:[#allocation0] ss:$16 sm:$0x3] %vm7, %v6
    %v9 = vld [vmem:[#allocation1] sm:$0x3]
    %10 = vrot.lane.b32.xlu0 %v9, 127
    %v11 = vpop.permute.xlu0 %10
    %vm12 = vcmask 7168
    %s13 = scalar_lea.vmem [#allocation0], 8
    %14 = vst.msk [vmem:[%s13] ss:$16 sm:$0x3] %vm12, %v11
    %s16 = sshllo.u32 0, 1
    %v18 = vld [vmem:[#allocation0] sm:%s16]
    %s19 = sshllo.u32 0, 1
    %20 = vst [vmem:[%s1] sm:%s19] %v18
    %s21 = scalar_lea.vmem [#allocation0], 8
    %v22 = vld [vmem:[%s21] sm:%s16]
    %s23 = sshllo.u32 0, 1
    %s24 = scalar_lea.vmem %s1, 1
    %25 = vst [vmem:[%s24] sm:%s23] %v22
    %s26 = scalar_lea.vmem [#allocation0], 16
    %v27 = vld [vmem:[%s26] sm:%s16]
    %s28 = sshllo.u32 0, 1
    %s29 = smul.addr 1, 2
    %s30 = scalar_lea.vmem %s1, %s29
    %31 = vst [vmem:[%s30] sm:%s28] %v27
    %s32 = scalar_lea.vmem [#allocation0], 24
    %v33 = vld [vmem:[%s32] sm:%s16]
    %s34 = sshllo.u32 0, 1
    %s35 = smul.addr 1, 3
    %s36 = scalar_lea.vmem %s1, %s35
    %37 = vst [vmem:[%s36] sm:%s34] %v33

// kernel: upsample_forward.2
$region0: #{upsample_forward.2}
  #allocation0 [shape = 'u32[]', space=smem, size = 0x4, offset = 0x4, fixed_abs, tag = 'smem constant byte address 0x4 - core index']
  #allocation1 [shape = 'u32[144,128]{1,0:T(1,128)}', space=vmem, size = 0x12000, scoped, tag = 'internal scratch']
  %s0 = inlined_call_operand.vmem [shape: f32[2,4,256], index: 0, kind: input, shape index: {}]
  %s1 = inlined_call_operand.vmem [shape: f32[2,4], index: 1, kind: input, shape index: {}]
  %s2 = inlined_call_operand.vmem [shape: f32[2,2,256], index: 2, kind: output, shape index: {0}]
  %s3 = inlined_call_operand.vmem [shape: f32[2,2,1], index: 3, kind: output, shape index: {1}]
  %s4 = inlined_call_operand.vmem [shape: f32[2,2,1], index: 4, kind: output, shape index: {2}]
  %5 = xla_tuple %s2, %s3, %s4
  %s6 = sld [smem:[#allocation0]]
  $region61: #{upsample_forward.2} parent=0
    _
  %s8 = ssub.s32 1, %s6
  %s9 = scalar_select 0, %s8, %s6
  loop: start=0, step=1, limit=4
  $region2: #{upsample_forward.2} parent=0 // loop_pre_header
    _
  $region3: #{upsample_forward.2} parent=0 // loop_header
    %s11 = sphi 0, %s15
    %p12 = scmp.ge.s32.totalorder %s11, 4
    %s18 = sphi 0, %s30
    %s19 = sphi 0, %s26
    %s20 = sphi 0, %s18
    %s21 = sphi 0, %s19
    %s22 = sphi 0, %s20
    %s23 = sphi 0, %s21
    %s35 = sphi 0, %s37
    %s38 = sphi 0, %s35
    %s39 = sphi 0, %s38
    %s55 = sphi 0, %s39
    %s59 = sphi 0, %s59
    %s61 = sphi 0, %s59
    %s62 = sphi 0, %s61
    %s76 = sphi 0, %s62
    %s84 = sphi 0, %s86
    %s87 = sphi 0, %s84
    %s88 = sphi 0, %s87
    %s104 = sphi 0, %s88
    %s110 = sphi 0, %s112
    %s113 = sphi 0, %s110
    %s114 = sphi 0, %s113
    %s130 = sphi 0, %s114
    %s136 = sphi 0, %s138
    %s139 = sphi 0, %s136
    %s140 = sphi 0, %s139
    %s156 = sphi 0, %s140
  $region4: #{upsample_forward.2} parent=0 // loop_header_branch
    %14 = sbr.rel (%p12) target = $region8
  $region5: #{upsample_forward.2} parent=0 // loop_body
    %s16 = ssub.s32 %s11, 1
    %s17 = ssub.s32 %s11, 2
    %s24 = sadd.s32 1, %s19
    %p25 = scmp.ge.s32.totalorder %s24, 1
    %s26 = scalar_select %p25, 0, %s24
    %s27 = sadd.s32 1, %s18
    %s28 = scalar_select %p25, %s27, %s18
    %p29 = scmp.ge.s32.totalorder %s28, 2
    %s30 = scalar_select %p29, 0, %s28
    %s31 = ssub.s32 %s18, %s30
    %s32 = ssub.s32 %s19, %s26
    %s33 = sor.u32 %s31, %s32
    %p34 = scmp.eq.s32.totalorder %s33, 0
    %s36 = sadd.s32 %s35, 1
    %s37 = scalar_select %p34, %s35, %s36
    %p40 = pneg %p34
    %p41 = scmp.eq.s32.totalorder %s11, 1
    %p42 = por %p40, %p41
    %p43 = scmp.ne.s32.totalorder %s35, %s38
    %p44 = scmp.eq.s32.totalorder %s11, 0
    %p45 = por %p43, %p44
    %p46 = scmp.ne.s32.totalorder %s35, %s38
    %p47 = scmp.eq.s32.totalorder %s16, 1
    %p48 = por %p46, %p47
    %p49 = scmp.ne.s32.totalorder %s38, %s39
    %p50 = scmp.eq.s32.totalorder %s16, 0
    %p51 = por %p49, %p50
    %p52 = scmp.ne.s32.totalorder %s38, %s39
    %p53 = scmp.eq.s32.totalorder %s17, 1
    %p54 = por %p52, %p53
    %p56 = scmp.ne.s32.totalorder %s39, %s55
    %p57 = scmp.eq.s32.totalorder %s17, 0
    %p58 = por %p56, %p57
    %s60 = sadd.s32 %s59, 1
    %p63 = scmp.eq.s32.totalorder %s11, 1
    %p64 = scmp.ne.s32.totalorder %s59, %s61
    %p65 = scmp.eq.s32.totalorder %s11, 0
    %p66 = por %p64, %p65
    %p67 = scmp.ne.s32.totalorder %s59, %s61
    %p68 = scmp.eq.s32.totalorder %s16, 1
    %p69 = por %p67, %p68
    %p70 = scmp.ne.s32.totalorder %s61, %s62
    %p71 = scmp.eq.s32.totalorder %s16, 0
    %p72 = por %p70, %p71
    %p73 = scmp.ne.s32.totalorder %s61, %s62
    %p74 = scmp.eq.s32.totalorder %s17, 1
    %p75 = por %p73, %p74
    %p77 = scmp.ne.s32.totalorder %s62, %s76
    %p78 = scmp.eq.s32.totalorder %s17, 0
    %p79 = por %p77, %p78
    %s80 = ssub.s32 %s18, %s30
    %s81 = ssub.s32 %s19, %s26
    %s82 = sor.u32 %s80, %s81
    %p83 = scmp.eq.s32.totalorder %s82, 0
    %s85 = sadd.s32 %s84, 1
    %s86 = scalar_select %p83, %s84, %s85
    %p89 = pneg %p83
    %p90 = scmp.eq.s32.totalorder %s11, 1
    %p91 = por %p89, %p90
    %p92 = scmp.ne.s32.totalorder %s84, %s87
    %p93 = scmp.eq.s32.totalorder %s11, 0
    %p94 = por %p92, %p93
    %p95 = scmp.ne.s32.totalorder %s84, %s87
    %p96 = scmp.eq.s32.totalorder %s16, 1
    %p97 = por %p95, %p96
    %p98 = scmp.ne.s32.totalorder %s87, %s88
    %p99 = scmp.eq.s32.totalorder %s16, 0
    %p100 = por %p98, %p99
    %p101 = scmp.ne.s32.totalorder %s87, %s88
    %p102 = scmp.eq.s32.totalorder %s17, 1
    %p103 = por %p101, %p102
    %p105 = scmp.ne.s32.totalorder %s88, %s104
    %p106 = scmp.eq.s32.totalorder %s17, 0
    %p107 = por %p105, %p106
    %s108 = ssub.s32 %s18, %s30
    %p109 = scmp.eq.s32.totalorder %s108, 0
    %s111 = sadd.s32 %s110, 1
    %s112 = scalar_select %p109, %s110, %s111
    %p115 = pneg %p109
    %p116 = scmp.eq.s32.totalorder %s11, 1
    %p117 = por %p115, %p116
    %p118 = scmp.ne.s32.totalorder %s110, %s113
    %p119 = scmp.eq.s32.totalorder %s11, 0
    %p120 = por %p118, %p119
    %p121 = scmp.ne.s32.totalorder %s110, %s113
    %p122 = scmp.eq.s32.totalorder %s16, 1
    %p123 = por %p121, %p122
    %p124 = scmp.ne.s32.totalorder %s113, %s114
    %p125 = scmp.eq.s32.totalorder %s16, 0
    %p126 = por %p124, %p125
    %p127 = scmp.ne.s32.totalorder %s113, %s114
    %p128 = scmp.eq.s32.totalorder %s17, 1
    %p129 = por %p127, %p128
    %p131 = scmp.ne.s32.totalorder %s114, %s130
    %p132 = scmp.eq.s32.totalorder %s17, 0
    %p133 = por %p131, %p132
    %s134 = ssub.s32 %s18, %s30
    %p135 = scmp.eq.s32.totalorder %s134, 0
    %s137 = sadd.s32 %s136, 1
    %s138 = scalar_select %p135, %s136, %s137
    %p141 = pneg %p135
    %p142 = scmp.eq.s32.totalorder %s11, 1
    %p143 = por %p141, %p142
    %p144 = scmp.ne.s32.totalorder %s136, %s139
    %p145 = scmp.eq.s32.totalorder %s11, 0
    %p146 = por %p144, %p145
    %p147 = scmp.ne.s32.totalorder %s136, %s139
    %p148 = scmp.eq.s32.totalorder %s16, 1
    %p149 = por %p147, %p148
    %p150 = scmp.ne.s32.totalorder %s139, %s140
    %p151 = scmp.eq.s32.totalorder %s16, 0
    %p152 = por %p150, %p151
    %p153 = scmp.ne.s32.totalorder %s139, %s140
    %p154 = scmp.eq.s32.totalorder %s17, 1
    %p155 = por %p153, %p154
    %p157 = scmp.ne.s32.totalorder %s140, %s156
    %p158 = scmp.eq.s32.totalorder %s17, 0
    %p159 = por %p157, %p158
    %p160 = scmp.le.s32.totalorder 1, %s11
    %p161 = scmp.lt.s32.totalorder %s11, 3
    %p162 = pnand %p160, %p161
    %p163 = pneg %p162
    // Predicated region
    $region9: #{upsample_forward.2} parent=5 // pred_check
      _
    $region10: #{upsample_forward.2} parent=5 // pred_check_branch
      %165 = sbr.rel (%p162) target = $region12
    $region11: #{upsample_forward.2} parent=5 // pred_region
      %s166 = ssub.s32 %s11, 1
      // Predicated region
      $region13: #{upsample_forward.2} parent=11 // pred_check
        %p167 = pneg %p72
      $region14: #{upsample_forward.2} parent=11 // pred_check_branch
        %169 = sbr.rel (%p167) target = $region16
      $region15: #{upsample_forward.2} parent=11 // pred_region
        _
      $region16: #{upsample_forward.2} parent=11 // pred_fallthru
        _
    $region12: #{upsample_forward.2} parent=5 // pred_fallthru
      _
    %p170 = scmp.lt.s32.totalorder %s11, 2
    // Predicated region
    $region17: #{upsample_forward.2} parent=5 // pred_check
      %p171 = pneg %p170
    $region18: #{upsample_forward.2} parent=5 // pred_check_branch
      %173 = sbr.rel (%p171) target = $region20
    $region19: #{upsample_forward.2} parent=5 // pred_region
      // Predicated region
      $region21: #{upsample_forward.2} parent=19 // pred_check
        %p174 = pneg %p45
      $region22: #{upsample_forward.2} parent=19 // pred_check_branch
        %176 = sbr.rel (%p174) target = $region24
      $region23: #{upsample_forward.2} parent=19 // pred_region
        %s177 = smul.u32 2, %s19
        %p178 = scmp.lt.s32.totalorder %s18, 1
        %s179 = scalar_select %p178, %s18, 1
        %p180 = scmp.lt.s32.totalorder %s177, 1
        %s181 = scalar_select %p180, %s177, 1
        %s182 = smul.addr %s179, 2
        %s183 = sadd.s32 %s181, %s182
        %s184 = smul.addr %s183, 4
        %s185 = scalar_lea.vmem %s0, %s184
        %s186 = smul.u32 2, %s19
      $region24: #{upsample_forward.2} parent=19 // pred_fallthru
        _
    $region20: #{upsample_forward.2} parent=5 // pred_fallthru
      _
    %p187 = scmp.le.s32.totalorder 1, %s11
    %p188 = scmp.lt.s32.totalorder %s11, 3
    %p189 = pnand %p187, %p188
    %p190 = pneg %p189
    // Predicated region
    $region25: #{upsample_forward.2} parent=5 // pred_check
      _
    $region26: #{upsample_forward.2} parent=5 // pred_check_branch
      %192 = sbr.rel (%p189) target = $region28
    $region27: #{upsample_forward.2} parent=5 // pred_region
      %s193 = ssub.s32 %s11, 1
      %s194 = smul.u32 2, %s21
      %p195 = scmp.lt.s32.totalorder %s20, 1
      %s196 = scalar_select %p195, %s20, 1
      %p197 = scmp.lt.s32.totalorder %s194, 1
      %s198 = scalar_select %p197, %s194, 1
      %s199 = smul.addr %s196, 2
      %s200 = sadd.s32 %s198, %s199
      %s201 = smul.addr %s200, 4
      %s202 = scalar_lea.vmem %s0, %s201
      %p203 = pneg %p51
      %p204 = pneg %p48
      %p205 = pneg %p72
      %p206 = pneg %p69
      %p207 = pneg %p100
      %p208 = pneg %p97
      %s209 = smul.u32 2, %s21
      %p210 = scmp.lt.s32.totalorder %s20, 1
      %s211 = scalar_select %p210, %s20, 1
      %p212 = scmp.lt.s32.totalorder %s209, 1
      %s213 = scalar_select %p212, %s209, 1
      %s214 = smul.addr %s211, 2
      %s215 = sadd.s32 %s213, %s214
      %s216 = smul.addr %s215, 2
      %s217 = scalar_lea.vmem %s2, %s216
      %p218 = pneg %p126
      %p219 = pneg %p123
      %p220 = scmp.lt.s32.totalorder %s20, 1
      %s221 = scalar_select %p220, %s20, 1
      %s222 = smul.addr %s221, 2
      %s223 = scalar_lea.vmem %s3, %s222
      %p224 = pneg %p152
      %p225 = pneg %p149
      %p226 = scmp.lt.s32.totalorder %s20, 1
      %s227 = scalar_select %p226, %s20, 1
      %s228 = smul.addr %s227, 2
      %s229 = scalar_lea.vmem %s4, %s228
      %s230 = smul.u32 2, %s21
      %p231 = scmp.lt.s32.totalorder %s20, 1
      %s232 = scalar_select %p231, %s20, 1
      %p233 = scmp.lt.s32.totalorder %s230, 1
      %s234 = scalar_select %p233, %s230, 1
      %s235 = smul.addr %s232, 2
      %s236 = sadd.s32 %s234, %s235
      %s237 = smul.addr %s236, 4
      %s238 = scalar_lea.vmem %s0, %s237
      %s239 = smul.u32 2, %s21
      %s240 = smul.u32 2, %s21
      %p241 = scmp.lt.s32.totalorder %s20, 1
      %s242 = scalar_select %p241, %s20, 1
      %p243 = scmp.lt.s32.totalorder %s240, 1
      %s244 = scalar_select %p243, %s240, 1
      %s245 = smul.addr %s242, 2
      %s246 = sadd.s32 %s244, %s245
      %s247 = smul.addr %s246, 2
      %s248 = scalar_lea.vmem %s2, %s247
      %s249 = smul.u32 2, %s21
      %p250 = scmp.lt.s32.totalorder %s20, 1
      %s251 = scalar_select %p250, %s20, 1
      %s252 = smul.addr %s251, 2
      %s253 = scalar_lea.vmem %s3, %s252
      %p254 = scmp.lt.s32.totalorder %s20, 1
      %s255 = scalar_select %p254, %s20, 1
      %s256 = smul.addr %s255, 2
      %s257 = scalar_lea.vmem %s4, %s256
      %p258 = scmp.eq.s32.totalorder %s21, 0
      // Predicated region
      $region29: #{upsample_forward.2} parent=27 // pred_check
        %p259 = pneg %p258
      $region30: #{upsample_forward.2} parent=27 // pred_check_branch
        %261 = sbr.rel (%p259) target = $region32
      $region31: #{upsample_forward.2} parent=27 // pred_region
        %vm262 = vcmask 1024
        %263 = vst.msk [vmem:[%s253] sm:$0x3] %vm262, 0.0
        %264 = vst.msk [vmem:[%s257] sm:$0x3] %vm262, 0.0
      $region32: #{upsample_forward.2} parent=27 // pred_fallthru
        _
      %v265 = vld [vmem:[%s1] sm:$0x3]
      %v266 = vld [vmem:[%s238] sm:$0xff]
      %v268 = vcombine.high %v266, %v266
      %vm269 = vcmask 31744
      %v271 = vsel %vm269, %v265, 0
      %vm273 = vcmask 1043456
      %v274 = vsel %vm273, %v266, 0
      %v276 = vsel %vm273, %v268, 0
      %278 = vmatprep.subr.mxu0 %v276
      %279 = vmatpush1.msra.mxu0 %v274
      %280 = vmatprep.subr.mxu0 0.0
      %281 = vmatpush1.msra.mxu0 0.0
      %282 = vmatprep.subr.mxu0 0.0
      %283 = vmatpush1.msra.mxu0 0.0
      %284 = vmatprep.subr.mxu0 0.0
      %285 = vmatpush1.msra.mxu0 0.0
      %286 = vmatprep.subr.mxu0 0.0
      %287 = vmatpush1.msra.mxu0 0.0
      %288 = vmatprep.subr.mxu0 0.0
      %289 = vmatpush1.msra.mxu0 0.0
      %290 = vmatprep.subr.mxu0 0.0
      %291 = vmatpush1.msra.mxu0 0.0
      %292 = vmatprep.subr.mxu0 0.0
      %293 = vmatpush1.msra.mxu0 0.0
      %294 = vmatprep.subr.mxu0 0.0
      %295 = vmatpush1.msra.mxu0 0.0
      %296 = vmatprep.subr.mxu0 0.0
      %297 = vmatpush1.msra.mxu0 0.0
      %298 = vmatprep.subr.mxu0 0.0
      %299 = vmatpush1.msra.mxu0 0.0
      %300 = vmatprep.subr.mxu0 0.0
      %301 = vmatpush1.msra.mxu0 0.0
      %302 = vmatprep.subr.mxu0 0.0
      %303 = vmatpush1.msra.mxu0 0.0
      %304 = vmatprep.subr.mxu0 0.0
      %305 = vmatpush1.msra.mxu0 0.0
      %306 = vmatprep.subr.mxu0 0.0
      %307 = vmatpush1.msra.mxu0 0.0
      %308 = vmatprep.subr.mxu0 0.0
      %309 = vmatpush1.msra.mxu0 0.0
      %310 = vmatprep.subr.mxu0 0.0
      %311 = vmatpush1.msra.mxu0 0.0
      %312 = vmatprep.subr.mxu0 0.0
      %313 = vmatpush1.msra.mxu0 0.0
      %314 = vmatprep.subr.mxu0 0.0
      %315 = vmatpush1.msra.mxu0 0.0
      %316 = vmatprep.subr.mxu0 0.0
      %317 = vmatpush1.msra.mxu0 0.0
      %318 = vmatprep.subr.mxu0 0.0
      %319 = vmatpush1.msra.mxu0 0.0
      %320 = vmatprep.subr.mxu0 0.0
      %321 = vmatpush1.msra.mxu0 0.0
      %322 = vmatprep.subr.mxu0 0.0
      %323 = vmatpush1.msra.mxu0 0.0
      %324 = vmatprep.subr.mxu0 0.0
      %325 = vmatpush1.msra.mxu0 0.0
      %326 = vmatprep.subr.mxu0 0.0
      %327 = vmatpush1.msra.mxu0 0.0
      %328 = vmatprep.subr.mxu0 0.0
      %329 = vmatpush1.msra.mxu0 0.0
      %330 = vmatprep.subr.mxu0 0.0
      %331 = vmatpush1.msra.mxu0 0.0
      %332 = vmatprep.subr.mxu0 0.0
      %333 = vmatpush1.msra.mxu0 0.0
      %334 = vmatprep.subr.mxu0 0.0
      %335 = vmatpush1.msra.mxu0 0.0
      %336 = vmatprep.subr.mxu0 0.0
      %337 = vmatpush1.msra.mxu0 0.0
      %338 = vmatprep.subr.mxu0 0.0
      %339 = vmatpush1.msra.mxu0 0.0
      %340 = vmatprep.subr.mxu0 0.0
      %341 = vmatpush1.msra.mxu0 0.0
      %342 = vmatprep.mubr.f32.mxu0 0.0
      %343 = vmatmul.mubr.f32.gmra.mrb[0].mxu0 %v271
      %v344 = vpop.f32.mrb[0].mxu0
      %v345 = vadd.f32 0.0, %v344
      %v346 = vpop.f32.mrb[0].mxu0
      %v347 = vadd.f32 0.0, %v346
      %348 = vdwg.mxu0
      %v351 = vcombine.low %v345, %v347
      %v353 = vunpack.c.l.s4 1983009808
      %v354 = vunpack.c.0.s8 %v353
      %v355 = vlaneseq
      %v356 = vshrl.u32 %v355, 7
      %v357 = vsub.s32 %v354, %v356
      %v358 = vrot.slane %v351, %v357
      %360 = vst [vmem:[%s248] sm:$0xf] %v358
      %v361 = vld [vmem:[%s253] sm:$0x3]
      %vm362 = vcmask 1041408
      %v363 = vsel %vm362, %v345, 0.0
      %v364 = vsel %vm362, %v347, 0.0
      %v365 = vadd.f32 %v363, %v364
      %366 = vadd.xlane.f32.xlu0 %v365
      %v367 = vpop.xlane.xlu0 %366
      %v368 = vadd.f32 %v361, %v367
      %vm369 = vcmask 1024
      %370 = vst.msk [vmem:[%s253] sm:$0x3] %vm369, %v368
      %v371 = vld [vmem:[%s257] sm:$0x3]
      %v372 = vmul.f32 %v345, %v345
      %v373 = vmul.f32 %v347, %v347
      %v374 = vsel %vm362, %v372, 0.0
      %v375 = vsel %vm362, %v373, 0.0
      %v376 = vadd.f32 %v374, %v375
      %377 = vadd.xlane.f32.xlu0 %v376
      %v378 = vpop.xlane.xlu0 %377
      %v379 = vadd.f32 %v371, %v378
      %380 = vst.msk [vmem:[%s257] sm:$0x3] %vm369, %v379
      %s381 = smul.u32 2, %s21
      %p382 = scmp.lt.s32.totalorder %s20, 1
      %s383 = scalar_select %p382, %s20, 1
      %p384 = scmp.lt.s32.totalorder %s381, 1
      %s385 = scalar_select %p384, %s381, 1
      %s386 = smul.addr %s383, 2
      %s387 = sadd.s32 %s385, %s386
      %s388 = smul.addr %s387, 2
      %s389 = scalar_lea.vmem %s2, %s388
      %p390 = scmp.lt.s32.totalorder %s20, 1
      %s391 = scalar_select %p390, %s20, 1
      %s392 = smul.addr %s391, 2
      %s393 = scalar_lea.vmem %s3, %s392
      %p394 = scmp.lt.s32.totalorder %s20, 1
      %s395 = scalar_select %p394, %s20, 1
      %s396 = smul.addr %s395, 2
      %s397 = scalar_lea.vmem %s4, %s396
      // Predicated region
      $region33: #{upsample_forward.2} parent=27 // pred_check
        %p398 = pneg %p97
      $region34: #{upsample_forward.2} parent=27 // pred_check_branch
        %400 = sbr.rel (%p398) target = $region36
      $region35: #{upsample_forward.2} parent=27 // pred_region
        %s401 = smul.u32 2, %s21
      $region36: #{upsample_forward.2} parent=27 // pred_fallthru
        _
      // Predicated region
      $region37: #{upsample_forward.2} parent=27 // pred_check
        %p402 = pneg %p123
      $region38: #{upsample_forward.2} parent=27 // pred_check_branch
        %404 = sbr.rel (%p402) target = $region40
      $region39: #{upsample_forward.2} parent=27 // pred_region
        _
      $region40: #{upsample_forward.2} parent=27 // pred_fallthru
        _
      // Predicated region
      $region41: #{upsample_forward.2} parent=27 // pred_check
        %p405 = pneg %p149
      $region42: #{upsample_forward.2} parent=27 // pred_check_branch
        %407 = sbr.rel (%p405) target = $region44
      $region43: #{upsample_forward.2} parent=27 // pred_region
        _
      $region44: #{upsample_forward.2} parent=27 // pred_fallthru
        _
    $region28: #{upsample_forward.2} parent=5 // pred_fallthru
      _
    %p408 = scmp.le.s32.totalorder 2, %s11
    // Predicated region
    $region45: #{upsample_forward.2} parent=5 // pred_check
      %p409 = pneg %p408
    $region46: #{upsample_forward.2} parent=5 // pred_check_branch
      %411 = sbr.rel (%p409) target = $region48
    $region47: #{upsample_forward.2} parent=5 // pred_region
      %s412 = ssub.s32 %s11, 2
      // Predicated region
      $region49: #{upsample_forward.2} parent=47 // pred_check
        %p413 = pneg %p103
      $region50: #{upsample_forward.2} parent=47 // pred_check_branch
        %415 = sbr.rel (%p413) target = $region52
      $region51: #{upsample_forward.2} parent=47 // pred_region
        %s416 = smul.u32 2, %s23
        %p417 = scmp.lt.s32.totalorder %s22, 1
        %s418 = scalar_select %p417, %s22, 1
        %p419 = scmp.lt.s32.totalorder %s416, 1
        %s420 = scalar_select %p419, %s416, 1
        %s421 = smul.addr %s418, 2
        %s422 = sadd.s32 %s420, %s421
        %s423 = smul.addr %s422, 2
        %s424 = scalar_lea.vmem %s2, %s423
      $region52: #{upsample_forward.2} parent=47 // pred_fallthru
        _
      // Predicated region
      $region53: #{upsample_forward.2} parent=47 // pred_check
        %p425 = pneg %p129
      $region54: #{upsample_forward.2} parent=47 // pred_check_branch
        %427 = sbr.rel (%p425) target = $region56
      $region55: #{upsample_forward.2} parent=47 // pred_region
        %p428 = scmp.lt.s32.totalorder %s22, 1
        %s429 = scalar_select %p428, %s22, 1
        %s430 = smul.addr %s429, 2
        %s431 = scalar_lea.vmem %s3, %s430
      $region56: #{upsample_forward.2} parent=47 // pred_fallthru
        _
      // Predicated region
      $region57: #{upsample_forward.2} parent=47 // pred_check
        %p432 = pneg %p155
      $region58: #{upsample_forward.2} parent=47 // pred_check_branch
        %434 = sbr.rel (%p432) target = $region60
      $region59: #{upsample_forward.2} parent=47 // pred_region
        %p435 = scmp.lt.s32.totalorder %s22, 1
        %s436 = scalar_select %p435, %s22, 1
        %s437 = smul.addr %s436, 2
        %s438 = scalar_lea.vmem %s4, %s437
      $region60: #{upsample_forward.2} parent=47 // pred_fallthru
        _
    $region48: #{upsample_forward.2} parent=5 // pred_fallthru
      _
  $region6: #{upsample_forward.2} parent=0 // loop_footer
    %s15 = sadd.s32 1, %s11
  $region7: #{upsample_forward.2} parent=0 // loop_footer_branch
    %10 = sbr.rel target = $region3
  $region8: #{upsample_forward.2} parent=0 // loop_exit
    _

// kernel: upsample_forward.3
$region0: #{upsample_forward.3}
  #allocation0 [shape = 'u32[]', space=smem, size = 0x4, offset = 0x4, fixed_abs, tag = 'smem constant byte address 0x4 - core index']
  #allocation1 [shape = 'u32[144,128]{1,0:T(1,128)}', space=vmem, size = 0x12000, scoped, tag = 'internal scratch']
  #allocation2 [shape = 'f32[1]{0:T(128)S(6)}', space=smem, size = 0x200, scoped, tag = 'scoped memory for upsample_forward.3']
  %s0 = inlined_call_operand.vmem [shape: f32[4,16,16], index: 0, kind: input, shape index: {}]
  %s1 = inlined_call_operand.vmem [shape: f32[4,1,1], index: 1, kind: input, shape index: {}]
  %s2 = inlined_call_operand.vmem [shape: f32[4,1,1], index: 2, kind: input, shape index: {}]
  %s3 = inlined_call_operand.vmem [shape: f32[32,16], index: 3, kind: input, shape index: {}]
  %s4 = inlined_call_operand.vmem [shape: f32[16,32], index: 4, kind: input, shape index: {}]
  %s5 = inlined_call_operand.<no memory space> [shape: f32[1], index: 5, kind: input, shape index: {}]
  %s6 = inlined_call_operand.hbm [shape: f32[4,32,32], index: 6, kind: output, shape index: {}]
  %s7 = sld [smem:[#allocation0]]
  $region34: #{upsample_forward.3} parent=0
    _
  %s9 = ssub.s32 1, %s7
  %s10 = scalar_select 0, %s9, %s7
  %11 = sst [smem:[#allocation2]] %s5
  $region1: #{upsample_forward.3} parent=0
    #allocation3 [shape = 'u8[65536]{0}', space=vmem, size = 0x10000, scoped, tag = 'output window, operand 0, single buffered']
    #allocation4 [shape = 's32[1]{0}', space=sflag, size = 0x4, scoped, tag = 'scoped memory for upsample_forward.3']
    %12 = vsyncpa [#allocation4], 0
    // Predicated region
    $region2: #{upsample_forward.3} parent=1 // pred_check
      _
    $region3: #{upsample_forward.3} parent=1 // pred_check_branch
      %14 = sbr.rel (0) target = $region5
    $region4: #{upsample_forward.3} parent=1 // pred_region
      _
    $region5: #{upsample_forward.3} parent=1 // pred_fallthru
      _
    // Predicated region
    $region6: #{upsample_forward.3} parent=1 // pred_check
      _
    $region7: #{upsample_forward.3} parent=1 // pred_check_branch
      %16 = sbr.rel (0) target = $region9
    $region8: #{upsample_forward.3} parent=1 // pred_region
      _
    $region9: #{upsample_forward.3} parent=1 // pred_fallthru
      _
    // Predicated region
    $region10: #{upsample_forward.3} parent=1 // pred_check
      _
    $region11: #{upsample_forward.3} parent=1 // pred_check_branch
      %18 = sbr.rel (0) target = $region13
    $region12: #{upsample_forward.3} parent=1 // pred_region
      _
    $region13: #{upsample_forward.3} parent=1 // pred_fallthru
      _
    // Predicated region
    $region14: #{upsample_forward.3} parent=1 // pred_check
      _
    $region15: #{upsample_forward.3} parent=1 // pred_check_branch
      %20 = sbr.rel (0) target = $region17
    $region16: #{upsample_forward.3} parent=1 // pred_region
      _
    $region17: #{upsample_forward.3} parent=1 // pred_fallthru
      _
    // Predicated region
    $region18: #{upsample_forward.3} parent=1 // pred_check
      _
    $region19: #{upsample_forward.3} parent=1 // pred_check_branch
      %22 = sbr.rel (0) target = $region21
    $region20: #{upsample_forward.3} parent=1 // pred_region
      _
    $region21: #{upsample_forward.3} parent=1 // pred_fallthru
      _
    // Predicated region
    $region22: #{upsample_forward.3} parent=1 // pred_check
      _
    $region23: #{upsample_forward.3} parent=1 // pred_check_branch
      %24 = sbr.rel (0) target = $region25
    $region24: #{upsample_forward.3} parent=1 // pred_region
      _
    $region25: #{upsample_forward.3} parent=1 // pred_fallthru
      _
    %s25 = sld [smem:[#allocation2]]
    %v26 = vld [vmem:[%s0] sm:$0xff]
    %v27 = vld [vmem:[%s0 + $0x8] sm:$0xff]
    %v28 = vld [vmem:[%s0 + $0x10] sm:$0xff]
    %v29 = vld [vmem:[%s0 + $0x18] sm:$0xff]
    %v30 = vld [vmem:[%s0 + $0x20] sm:$0xff]
    %v31 = vld [vmem:[%s0 + $0x28] sm:$0xff]
    %v32 = vld [vmem:[%s0 + $0x30] sm:$0xff]
    %v33 = vld [vmem:[%s0 + $0x38] sm:$0xff]
    %v34 = vld [vmem:[%s1] sm:$0x1]
    %v35 = vld [vmem:[%s1 + $0x1] sm:$0x1]
    %v36 = vld [vmem:[%s1 + $0x2] sm:$0x1]
    %v37 = vld [vmem:[%s1 + $0x3] sm:$0x1]
    %v42 = vlaneseq
    %v43 = vshrl.u32 %v42, 7
    %v44 = vsub.s32 0, %v43
    %v45 = vrot.slane %v34, %v44
    %v46 = vlaneseq
    %v47 = vshrl.u32 %v46, 7
    %v48 = vsub.s32 0, %v47
    %v49 = vrot.slane %v35, %v48
    %v50 = vlaneseq
    %v51 = vshrl.u32 %v50, 7
    %v52 = vsub.s32 0, %v51
    %v53 = vrot.slane %v36, %v52
    %v54 = vlaneseq
    %v55 = vshrl.u32 %v54, 7
    %v56 = vsub.s32 0, %v55
    %v57 = vrot.slane %v37, %v56
    %58 = vset.pattern.permute.xlu0 0
    %59 = vperm.xlu0 %58, %v45
    %v60 = vpop.permute.xlu0 %59
    %62 = vset.pattern.permute.xlu0 0
    %63 = vperm.xlu0 %62, %v49
    %v64 = vpop.permute.xlu0 %63
    %66 = vset.pattern.permute.xlu0 0
    %67 = vperm.xlu0 %66, %v53
    %v68 = vpop.permute.xlu0 %67
    %70 = vset.pattern.permute.xlu0 0
    %71 = vperm.xlu0 %70, %v57
    %v72 = vpop.permute.xlu0 %71
    %v74 = vmul.f32 %v26, %v60
    %v75 = vmul.f32 %v27, %v60
    %v76 = vmul.f32 %v28, %v64
    %v77 = vmul.f32 %v29, %v64
    %v78 = vmul.f32 %v30, %v68
    %v79 = vmul.f32 %v31, %v68
    %v80 = vmul.f32 %v32, %v72
    %v81 = vmul.f32 %v33, %v72
    %v82 = vld [vmem:[%s2] sm:$0x1]
    %v83 = vld [vmem:[%s2 + $0x1] sm:$0x1]
    %v84 = vld [vmem:[%s2 + $0x2] sm:$0x1]
    %v85 = vld [vmem:[%s2 + $0x3] sm:$0x1]
    %v90 = vlaneseq
    %v91 = vshrl.u32 %v90, 7
    %v92 = vsub.s32 0, %v91
    %v93 = vrot.slane %v82, %v92
    %v94 = vlaneseq
    %v95 = vshrl.u32 %v94, 7
    %v96 = vsub.s32 0, %v95
    %v97 = vrot.slane %v83, %v96
    %v98 = vlaneseq
    %v99 = vshrl.u32 %v98, 7
    %v100 = vsub.s32 0, %v99
    %v101 = vrot.slane %v84, %v100
    %v102 = vlaneseq
    %v103 = vshrl.u32 %v102, 7
    %v104 = vsub.s32 0, %v103
    %v105 = vrot.slane %v85, %v104
    %106 = vset.pattern.permute.xlu0 0
    %107 = vperm.xlu0 %106, %v93
    %v108 = vpop.permute.xlu0 %107
    %110 = vset.pattern.permute.xlu0 0
    %111 = vperm.xlu0 %110, %v97
    %v112 = vpop.permute.xlu0 %111
    %114 = vset.pattern.permute.xlu0 0
    %115 = vperm.xlu0 %114, %v101
    %v116 = vpop.permute.xlu0 %115
    %118 = vset.pattern.permute.xlu0 0
    %119 = vperm.xlu0 %118, %v105
    %v120 = vpop.permute.xlu0 %119
    %v122 = vadd.f32 %v74, %v108
    %v123 = vadd.f32 %v75, %v108
    %v124 = vadd.f32 %v76, %v112
    %v125 = vadd.f32 %v77, %v112
    %v126 = vadd.f32 %v78, %v116
    %v127 = vadd.f32 %v79, %v116
    %v128 = vadd.f32 %v80, %v120
    %v129 = vadd.f32 %v81, %v120
    %vm130 = vcmp.ge.f32.partialorder %v122, 0.0
    %vm131 = vcmp.ge.f32.partialorder %v123, 0.0
    %vm132 = vcmp.ge.f32.partialorder %v124, 0.0
    %vm133 = vcmp.ge.f32.partialorder %v125, 0.0
    %vm134 = vcmp.ge.f32.partialorder %v126, 0.0
    %vm135 = vcmp.ge.f32.partialorder %v127, 0.0
    %vm136 = vcmp.ge.f32.partialorder %v128, 0.0
    %vm137 = vcmp.ge.f32.partialorder %v129, 0.0
    %v138 = vstv %s25
    %v139 = vmul.f32 %v138, %v122
    %v140 = vmul.f32 %v138, %v123
    %v141 = vmul.f32 %v138, %v124
    %v142 = vmul.f32 %v138, %v125
    %v143 = vmul.f32 %v138, %v126
    %v144 = vmul.f32 %v138, %v127
    %v145 = vmul.f32 %v138, %v128
    %v146 = vmul.f32 %v138, %v129
    %v147 = vsel %vm130, %v122, %v139
    %v148 = vsel %vm131, %v123, %v140
    %v149 = vsel %vm132, %v124, %v141
    %v150 = vsel %vm133, %v125, %v142
    %v151 = vsel %vm134, %v126, %v143
    %v152 = vsel %vm135, %v127, %v144
    %v153 = vsel %vm136, %v128, %v145
    %v154 = vsel %vm137, %v129, %v146
    %v155 = vld [vmem:[%s3] sm:$0xff]
    %v156 = vld [vmem:[%s3 + $0x8] sm:$0xff]
    %v157 = vld [vmem:[%s3 + $0x10] sm:$0xff]
    %v158 = vld [vmem:[%s3 + $0x18] sm:$0xff]
    %v159 = vld [vmem:[%s4] sm:$0xff]
    %v160 = vld [vmem:[%s4 + $0x8] sm:$0xff]
    %vm161 = vcmask 130048
    %v163 = vsel %vm161, %v155, 0
    %v166 = vsel %vm161, %v156, 0
    %v169 = vsel %vm161, %v157, 0
    %v172 = vsel %vm161, %v158, 0
    %174 = vmatprep.subr.mxu0 0.0
    %175 = vmatpush1.msra.mxu0 %v147
    %176 = vmatprep.subr.mxu0 0.0
    %177 = vmatpush1.msra.mxu0 %v148
    %178 = vmatprep.subr.mxu0 0.0
    %179 = vmatpush1.msra.mxu0 0.0
    %180 = vmatprep.subr.mxu0 0.0
    %181 = vmatpush1.msra.mxu0 0.0
    %182 = vmatprep.subr.mxu0 0.0
    %183 = vmatpush1.msra.mxu0 0.0
    %184 = vmatprep.subr.mxu0 0.0
    %185 = vmatpush1.msra.mxu0 0.0
    %186 = vmatprep.subr.mxu0 0.0
    %187 = vmatpush1.msra.mxu0 0.0
    %188 = vmatprep.subr.mxu0 0.0
    %189 = vmatpush1.msra.mxu0 0.0
    %190 = vmatprep.subr.mxu0 0.0
    %191 = vmatpush1.msra.mxu0 0.0
    %192 = vmatprep.subr.mxu0 0.0
    %193 = vmatpush1.msra.mxu0 0.0
    %194 = vmatprep.subr.mxu0 0.0
    %195 = vmatpush1.msra.mxu0 0.0
    %196 = vmatprep.subr.mxu0 0.0
    %197 = vmatpush1.msra.mxu0 0.0
    %198 = vmatprep.subr.mxu0 0.0
    %199 = vmatpush1.msra.mxu0 0.0
    %200 = vmatprep.subr.mxu0 0.0
    %201 = vmatpush1.msra.mxu0 0.0
    %202 = vmatprep.subr.mxu0 0.0
    %203 = vmatpush1.msra.mxu0 0.0
    %204 = vmatprep.subr.mxu0 0.0
    %205 = vmatpush1.msra.mxu0 0.0
    %206 = vmatprep.subr.mxu0 0.0
    %207 = vmatpush1.msra.mxu0 0.0
    %208 = vmatprep.subr.mxu0 0.0
    %209 = vmatpush1.msra.mxu0 0.0
    %210 = vmatprep.subr.mxu0 0.0
    %211 = vmatpush1.msra.mxu0 0.0
    %212 = vmatprep.subr.mxu0 0.0
    %213 = vmatpush1.msra.mxu0 0.0
    %214 = vmatprep.subr.mxu0 0.0
    %215 = vmatpush1.msra.mxu0 0.0
    %216 = vmatprep.subr.mxu0 0.0
    %217 = vmatpush1.msra.mxu0 0.0
    %218 = vmatprep.subr.mxu0 0.0
    %219 = vmatpush1.msra.mxu0 0.0
    %220 = vmatprep.subr.mxu0 0.0
    %221 = vmatpush1.msra.mxu0 0.0
    %222 = vmatprep.subr.mxu0 0.0
    %223 = vmatpush1.msra.mxu0 0.0
    %224 = vmatprep.subr.mxu0 0.0
    %225 = vmatpush1.msra.mxu0 0.0
    %226 = vmatprep.subr.mxu0 0.0
    %227 = vmatpush1.msra.mxu0 0.0
    %228 = vmatprep.subr.mxu0 0.0
    %229 = vmatpush1.msra.mxu0 0.0
    %230 = vmatprep.subr.mxu0 0.0
    %231 = vmatpush1.msra.mxu0 0.0
    %232 = vmatprep.subr.mxu0 0.0
    %233 = vmatpush1.msra.mxu0 0.0
    %234 = vmatprep.subr.mxu0 0.0
    %235 = vmatpush1.msra.mxu0 0.0
    %236 = vmatprep.subr.mxu0 0.0
    %237 = vmatpush1.msra.mxu0 0.0
    %238 = vmatprep.mubr.f32.mxu0 0.0
    %239 = vmatmul.mubr.f32.gmra.mrb[0].mxu0 %v163
    %v240 = vpop.f32.mrb[0].mxu0
    %v241 = vadd.f32 0.0, %v240
    %v242 = vpop.f32.mrb[0].mxu0
    %243 = vmatprep.mubr.f32.mxu0 0.0
    %244 = vmatmul.mubr.f32.gmra.mrb[0].mxu0 %v166
    %v245 = vpop.f32.mrb[0].mxu0
    %v246 = vadd.f32 0.0, %v245
    %v247 = vpop.f32.mrb[0].mxu0
    %248 = vmatprep.mubr.f32.mxu0 0.0
    %249 = vmatmul.mubr.f32.gmra.mrb[0].mxu0 %v169
    %v250 = vpop.f32.mrb[0].mxu0
    %v251 = vadd.f32 0.0, %v250
    %v252 = vpop.f32.mrb[0].mxu0
    %253 = vmatprep.mubr.f32.mxu0 0.0
    %254 = vmatmul.mubr.f32.gmra.mrb[0].mxu0 %v172
    %v255 = vpop.f32.mrb[0].mxu0
    %v256 = vadd.f32 0.0, %v255
    %v257 = vpop.f32.mrb[0].mxu0
    %258 = vdwg.mxu0
    %v260 = vsel %vm161, %v241, 0
    %v263 = vsel %vm161, %v246, 0
    %v266 = vsel %vm161, %v251, 0
    %v269 = vsel %vm161, %v256, 0
    %271 = vmatprep.subr.mxu0 0.0
    %272 = vmatpush1.msra.mxu0 %v159
    %273 = vmatprep.subr.mxu0 0.0
    %274 = vmatpush1.msra.mxu0 %v160
    %275 = vmatprep.subr.mxu0 0.0
    %276 = vmatpush1.msra.mxu0 0.0
    %277 = vmatprep.subr.mxu0 0.0
    %278 = vmatpush1.msra.mxu0 0.0
    %279 = vmatprep.subr.mxu0 0.0
    %280 = vmatpush1.msra.mxu0 0.0
    %281 = vmatprep.subr.mxu0 0.0
    %282 = vmatpush1.msra.mxu0 0.0
    %283 = vmatprep.subr.mxu0 0.0
    %284 = vmatpush1.msra.mxu0 0.0
    %285 = vmatprep.subr.mxu0 0.0
    %286 = vmatpush1.msra.mxu0 0.0
    %287 = vmatprep.subr.mxu0 0.0
    %288 = vmatpush1.msra.mxu0 0.0
    %289 = vmatprep.subr.mxu0 0.0
    %290 = vmatpush1.msra.mxu0 0.0
    %291 = vmatprep.subr.mxu0 0.0
    %292 = vmatpush1.msra.mxu0 0.0
    %293 = vmatprep.subr.mxu0 0.0
    %294 = vmatpush1.msra.mxu0 0.0
    %295 = vmatprep.subr.mxu0 0.0
    %296 = vmatpush1.msra.mxu0 0.0
    %297 = vmatprep.subr.mxu0 0.0
    %298 = vmatpush1.msra.mxu0 0.0
    %299 = vmatprep.subr.mxu0 0.0
    %300 = vmatpush1.msra.mxu0 0.0
    %301 = vmatprep.subr.mxu0 0.0
    %302 = vmatpush1.msra.mxu0 0.0
    %303 = vmatprep.subr.mxu0 0.0
    %304 = vmatpush1.msra.mxu0 0.0
    %305 = vmatprep.subr.mxu0 0.0
    %306 = vmatpush1.msra.mxu0 0.0
    %307 = vmatprep.subr.mxu0 0.0
    %308 = vmatpush1.msra.mxu0 0.0
    %309 = vmatprep.subr.mxu0 0.0
    %310 = vmatpush1.msra.mxu0 0.0
    %311 = vmatprep.subr.mxu0 0.0
    %312 = vmatpush1.msra.mxu0 0.0
    %313 = vmatprep.subr.mxu0 0.0
    %314 = vmatpush1.msra.mxu0 0.0
    %315 = vmatprep.subr.mxu0 0.0
    %316 = vmatpush1.msra.mxu0 0.0
    %317 = vmatprep.subr.mxu0 0.0
    %318 = vmatpush1.msra.mxu0 0.0
    %319 = vmatprep.subr.mxu0 0.0
    %320 = vmatpush1.msra.mxu0 0.0
    %321 = vmatprep.subr.mxu0 0.0
    %322 = vmatpush1.msra.mxu0 0.0
    %323 = vmatprep.subr.mxu0 0.0
    %324 = vmatpush1.msra.mxu0 0.0
    %325 = vmatprep.subr.mxu0 0.0
    %326 = vmatpush1.msra.mxu0 0.0
    %327 = vmatprep.subr.mxu0 0.0
    %328 = vmatpush1.msra.mxu0 0.0
    %329 = vmatprep.subr.mxu0 0.0
    %330 = vmatpush1.msra.mxu0 0.0
    %331 = vmatprep.subr.mxu0 0.0
    %332 = vmatpush1.msra.mxu0 0.0
    %333 = vmatprep.subr.mxu0 0.0
    %334 = vmatpush1.msra.mxu0 0.0
    %335 = vmatprep.mubr.f32.mxu0 0.0
    %336 = vmatmul.mubr.f32.gmra.mrb[0].mxu0 %v260
    %v337 = vpop.f32.mrb[0].mxu0
    %v338 = vadd.f32 0.0, %v337
    %v339 = vpop.f32.mrb[0].mxu0
    %340 = vmatprep.mubr.f32.mxu0 0.0
    %341 = vmatmul.mubr.f32.gmra.mrb[0].mxu0 %v263
    %v342 = vpop.f32.mrb[0].mxu0
    %v343 = vadd.f32 0.0, %v342
    %v344 = vpop.f32.mrb[0].mxu0
    %345 = vmatprep.mubr.f32.mxu0 0.0
    %346 = vmatmul.mubr.f32.gmra.mrb[0].mxu0 %v266
    %v347 = vpop.f32.mrb[0].mxu0
    %v348 = vadd.f32 0.0, %v347
    %v349 = vpop.f32.mrb[0].mxu0
    %350 = vmatprep.mubr.f32.mxu0 0.0
    %351 = vmatmul.mubr.f32.gmra.mrb[0].mxu0 %v269
    %v352 = vpop.f32.mrb[0].mxu0
    %v353 = vadd.f32 0.0, %v352
    %v354 = vpop.f32.mrb[0].mxu0
    %355 = vdwg.mxu0
    %vm356 = vcmask 261120
    %357 = vst.msk [vmem:[#allocation3] sm:$0xff] %vm356, %v338
    %358 = vst.msk [vmem:[#allocation3 + $0x8] sm:$0xff] %vm356, %v343
    %359 = vst.msk [vmem:[#allocation3 + $0x10] sm:$0xff] %vm356, %v348
    %360 = vst.msk [vmem:[#allocation3 + $0x18] sm:$0xff] %vm356, %v353
    %361 = vmatprep.subr.mxu0 0.0
    %362 = vmatpush1.msra.mxu0 %v149
    %363 = vmatprep.subr.mxu0 0.0
    %364 = vmatpush1.msra.mxu0 %v150
    %365 = vmatprep.subr.mxu0 0.0
    %366 = vmatpush1.msra.mxu0 0.0
    %367 = vmatprep.subr.mxu0 0.0
    %368 = vmatpush1.msra.mxu0 0.0
    %369 = vmatprep.subr.mxu0 0.0
    %370 = vmatpush1.msra.mxu0 0.0
    %371 = vmatprep.subr.mxu0 0.0
    %372 = vmatpush1.msra.mxu0 0.0
    %373 = vmatprep.subr.mxu0 0.0
    %374 = vmatpush1.msra.mxu0 0.0
    %375 = vmatprep.subr.mxu0 0.0
    %376 = vmatpush1.msra.mxu0 0.0
    %377 = vmatprep.subr.mxu0 0.0
    %378 = vmatpush1.msra.mxu0 0.0
    %379 = vmatprep.subr.mxu0 0.0
    %380 = vmatpush1.msra.mxu0 0.0
    %381 = vmatprep.subr.mxu0 0.0
    %382 = vmatpush1.msra.mxu0 0.0
    %383 = vmatprep.subr.mxu0 0.0
    %384 = vmatpush1.msra.mxu0 0.0
    %385 = vmatprep.subr.mxu0 0.0
    %386 = vmatpush1.msra.mxu0 0.0
    %387 = vmatprep.subr.mxu0 0.0
    %388 = vmatpush1.msra.mxu0 0.0
    %389 = vmatprep.subr.mxu0 0.0
    %390 = vmatpush1.msra.mxu0 0.0
    %391 = vmatprep.subr.mxu0 0.0
    %392 = vmatpush1.msra.mxu0 0.0
    %393 = vmatprep.subr.mxu0 0.0
    %394 = vmatpush1.msra.mxu0 0.0
    %395 = vmatprep.subr.mxu0 0.0
    %396 = vmatpush1.msra.mxu0 0.0
    %397 = vmatprep.subr.mxu0 0.0
    %398 = vmatpush1.msra.mxu0 0.0
    %399 = vmatprep.subr.mxu0 0.0
    %400 = vmatpush1.msra.mxu0 0.0
    %401 = vmatprep.subr.mxu0 0.0
    %402 = vmatpush1.msra.mxu0 0.0
    %403 = vmatprep.subr.mxu0 0.0
    %404 = vmatpush1.msra.mxu0 0.0
    %405 = vmatprep.subr.mxu0 0.0
    %406 = vmatpush1.msra.mxu0 0.0
    %407 = vmatprep.subr.mxu0 0.0
    %408 = vmatpush1.msra.mxu0 0.0
    %409 = vmatprep.subr.mxu0 0.0
    %410 = vmatpush1.msra.mxu0 0.0
    %411 = vmatprep.subr.mxu0 0.0
    %412 = vmatpush1.msra.mxu0 0.0
    %413 = vmatprep.subr.mxu0 0.0
    %414 = vmatpush1.msra.mxu0 0.0
    %415 = vmatprep.subr.mxu0 0.0
    %416 = vmatpush1.msra.mxu0 0.0
    %417 = vmatprep.subr.mxu0 0.0
    %418 = vmatpush1.msra.mxu0 0.0
    %419 = vmatprep.subr.mxu0 0.0
    %420 = vmatpush1.msra.mxu0 0.0
    %421 = vmatprep.subr.mxu0 0.0
    %422 = vmatpush1.msra.mxu0 0.0
    %423 = vmatprep.subr.mxu0 0.0
    %424 = vmatpush1.msra.mxu0 0.0
    %425 = vmatprep.mubr.f32.mxu0 0.0
    %426 = vmatmul.mubr.f32.gmra.mrb[0].mxu0 %v163
    %v427 = vpop.f32.mrb[0].mxu0
    %v428 = vadd.f32 0.0, %v427
    %v429 = vpop.f32.mrb[0].mxu0
    %430 = vmatprep.mubr.f32.mxu0 0.0
    %431 = vmatmul.mubr.f32.gmra.mrb[0].mxu0 %v166
    %v432 = vpop.f32.mrb[0].mxu0
    %v433 = vadd.f32 0.0, %v432
    %v434 = vpop.f32.mrb[0].mxu0
    %435 = vmatprep.mubr.f32.mxu0 0.0
    %436 = vmatmul.mubr.f32.gmra.mrb[0].mxu0 %v169
    %v437 = vpop.f32.mrb[0].mxu0
    %v438 = vadd.f32 0.0, %v437
    %v439 = vpop.f32.mrb[0].mxu0
    %440 = vmatprep.mubr.f32.mxu0 0.0
    %441 = vmatmul.mubr.f32.gmra.mrb[0].mxu0 %v172
    %v442 = vpop.f32.mrb[0].mxu0
    %v443 = vadd.f32 0.0, %v442
    %v444 = vpop.f32.mrb[0].mxu0
    %445 = vdwg.mxu0
    %v447 = vsel %vm161, %v428, 0
    %v450 = vsel %vm161, %v433, 0
    %v453 = vsel %vm161, %v438, 0
    %v456 = vsel %vm161, %v443, 0
    %458 = vmatprep.subr.mxu0 0.0
    %459 = vmatpush1.msra.mxu0 %v159
    %460 = vmatprep.subr.mxu0 0.0
    %461 = vmatpush1.msra.mxu0 %v160
    %462 = vmatprep.subr.mxu0 0.0
    %463 = vmatpush1.msra.mxu0 0.0
    %464 = vmatprep.subr.mxu0 0.0
    %465 = vmatpush1.msra.mxu0 0.0
    %466 = vmatprep.subr.mxu0 0.0
    %467 = vmatpush1.msra.mxu0 0.0
    %468 = vmatprep.subr.mxu0 0.0
    %469 = vmatpush1.msra.mxu0 0.0
    %470 = vmatprep.subr.mxu0 0.0
    %471 = vmatpush1.msra.mxu0 0.0
    %472 = vmatprep.subr.mxu0 0.0
    %473 = vmatpush1.msra.mxu0 0.0
    %474 = vmatprep.subr.mxu0 0.0
    %475 = vmatpush1.msra.mxu0 0.0
    %476 = vmatprep.subr.mxu0 0.0
    %477 = vmatpush1.msra.mxu0 0.0
    %478 = vmatprep.subr.mxu0 0.0
    %479 = vmatpush1.msra.mxu0 0.0
    %480 = vmatprep.subr.mxu0 0.0
    %481 = vmatpush1.msra.mxu0 0.0
    %482 = vmatprep.subr.mxu0 0.0
    %483 = vmatpush1.msra.mxu0 0.0
    %484 = vmatprep.subr.mxu0 0.0
    %485 = vmatpush1.msra.mxu0 0.0
    %486 = vmatprep.subr.mxu0 0.0
    %487 = vmatpush1.msra.mxu0 0.0
    %488 = vmatprep.subr.mxu0 0.0
    %489 = vmatpush1.msra.mxu0 0.0
    %490 = vmatprep.subr.mxu0 0.0
    %491 = vmatpush1.msra.mxu0 0.0
    %492 = vmatprep.subr.mxu0 0.0
    %493 = vmatpush1.msra.mxu0 0.0
    %494 = vmatprep.subr.mxu0 0.0
    %495 = vmatpush1.msra.mxu0 0.0
    %496 = vmatprep.subr.mxu0 0.0
    %497 = vmatpush1.msra.mxu0 0.0
    %498 = vmatprep.subr.mxu0 0.0
    %499 = vmatpush1.msra.mxu0 0.0
    %500 = vmatprep.subr.mxu0 0.0
    %501 = vmatpush1.msra.mxu0 0.0
    %502 = vmatprep.subr.mxu0 0.0
    %503 = vmatpush1.msra.mxu0 0.0
    %504 = vmatprep.subr.mxu0 0.0
    %505 = vmatpush1.msra.mxu0 0.0
    %506 = vmatprep.subr.mxu0 0.0
    %507 = vmatpush1.msra.mxu0 0.0
    %508 = vmatprep.subr.mxu0 0.0
    %509 = vmatpush1.msra.mxu0 0.0
    %510 = vmatprep.subr.mxu0 0.0
    %511 = vmatpush1.msra.mxu0 0.0
    %512 = vmatprep.subr.mxu0 0.0
    %513 = vmatpush1.msra.mxu0 0.0
    %514 = vmatprep.subr.mxu0 0.0
    %515 = vmatpush1.msra.mxu0 0.0
    %516 = vmatprep.subr.mxu0 0.0
    %517 = vmatpush1.msra.mxu0 0.0
    %518 = vmatprep.subr.mxu0 0.0
    %519 = vmatpush1.msra.mxu0 0.0
    %520 = vmatprep.subr.mxu0 0.0
    %521 = vmatpush1.msra.mxu0 0.0
    %522 = vmatprep.mubr.f32.mxu0 0.0
    %523 = vmatmul.mubr.f32.gmra.mrb[0].mxu0 %v447
    %v524 = vpop.f32.mrb[0].mxu0
    %v525 = vadd.f32 0.0, %v524
    %v526 = vpop.f32.mrb[0].mxu0
    %527 = vmatprep.mubr.f32.mxu0 0.0
    %528 = vmatmul.mubr.f32.gmra.mrb[0].mxu0 %v450
    %v529 = vpop.f32.mrb[0].mxu0
    %v530 = vadd.f32 0.0, %v529
    %v531 = vpop.f32.mrb[0].mxu0
    %532 = vmatprep.mubr.f32.mxu0 0.0
    %533 = vmatmul.mubr.f32.gmra.mrb[0].mxu0 %v453
    %v534 = vpop.f32.mrb[0].mxu0
    %v535 = vadd.f32 0.0, %v534
    %v536 = vpop.f32.mrb[0].mxu0
    %537 = vmatprep.mubr.f32.mxu0 0.0
    %538 = vmatmul.mubr.f32.gmra.mrb[0].mxu0 %v456
    %v539 = vpop.f32.mrb[0].mxu0
    %v540 = vadd.f32 0.0, %v539
    %v541 = vpop.f32.mrb[0].mxu0
    %542 = vdwg.mxu0
    %s543 = scalar_lea.vmem [#allocation3], 32
    %544 = vst.msk [vmem:[%s543] sm:$0xff] %vm356, %v525
    %545 = vst.msk [vmem:[%s543 + $0x8] sm:$0xff] %vm356, %v530
    %546 = vst.msk [vmem:[%s543 + $0x10] sm:$0xff] %vm356, %v535
    %547 = vst.msk [vmem:[%s543 + $0x18] sm:$0xff] %vm356, %v540
    %548 = vmatprep.subr.mxu0 0.0
    %549 = vmatpush1.msra.mxu0 %v151
    %550 = vmatprep.subr.mxu0 0.0
    %551 = vmatpush1.msra.mxu0 %v152
    %552 = vmatprep.subr.mxu0 0.0
    %553 = vmatpush1.msra.mxu0 0.0
    %554 = vmatprep.subr.mxu0 0.0
    %555 = vmatpush1.msra.mxu0 0.0
    %556 = vmatprep.subr.mxu0 0.0
    %557 = vmatpush1.msra.mxu0 0.0
    %558 = vmatprep.subr.mxu0 0.0
    %559 = vmatpush1.msra.mxu0 0.0
    %560 = vmatprep.subr.mxu0 0.0
    %561 = vmatpush1.msra.mxu0 0.0
    %562 = vmatprep.subr.mxu0 0.0
    %563 = vmatpush1.msra.mxu0 0.0
    %564 = vmatprep.subr.mxu0 0.0
    %565 = vmatpush1.msra.mxu0 0.0
    %566 = vmatprep.subr.mxu0 0.0
    %567 = vmatpush1.msra.mxu0 0.0
    %568 = vmatprep.subr.mxu0 0.0
    %569 = vmatpush1.msra.mxu0 0.0
    %570 = vmatprep.subr.mxu0 0.0
    %571 = vmatpush1.msra.mxu0 0.0
    %572 = vmatprep.subr.mxu0 0.0
    %573 = vmatpush1.msra.mxu0 0.0
    %574 = vmatprep.subr.mxu0 0.0
    %575 = vmatpush1.msra.mxu0 0.0
    %576 = vmatprep.subr.mxu0 0.0
    %577 = vmatpush1.msra.mxu0 0.0
    %578 = vmatprep.subr.mxu0 0.0
    %579 = vmatpush1.msra.mxu0 0.0
    %580 = vmatprep.subr.mxu0 0.0
    %581 = vmatpush1.msra.mxu0 0.0
    %582 = vmatprep.subr.mxu0 0.0
    %583 = vmatpush1.msra.mxu0 0.0
    %584 = vmatprep.subr.mxu0 0.0
    %585 = vmatpush1.msra.mxu0 0.0
    %586 = vmatprep.subr.mxu0 0.0
    %587 = vmatpush1.msra.mxu0 0.0
    %588 = vmatprep.subr.mxu0 0.0
    %589 = vmatpush1.msra.mxu0 0.0
    %590 = vmatprep.subr.mxu0 0.0
    %591 = vmatpush1.msra.mxu0 0.0
    %592 = vmatprep.subr.mxu0 0.0
    %593 = vmatpush1.msra.mxu0 0.0
    %594 = vmatprep.subr.mxu0 0.0
    %595 = vmatpush1.msra.mxu0 0.0
    %596 = vmatprep.subr.mxu0 0.0
    %597 = vmatpush1.msra.mxu0 0.0
    %598 = vmatprep.subr.mxu0 0.0
    %599 = vmatpush1.msra.mxu0 0.0
    %600 = vmatprep.subr.mxu0 0.0
    %601 = vmatpush1.msra.mxu0 0.0
    %602 = vmatprep.subr.mxu0 0.0
    %603 = vmatpush1.msra.mxu0 0.0
    %604 = vmatprep.subr.mxu0 0.0
    %605 = vmatpush1.msra.mxu0 0.0
    %606 = vmatprep.subr.mxu0 0.0
    %607 = vmatpush1.msra.mxu0 0.0
    %608 = vmatprep.subr.mxu0 0.0
    %609 = vmatpush1.msra.mxu0 0.0
    %610 = vmatprep.subr.mxu0 0.0
    %611 = vmatpush1.msra.mxu0 0.0
    %612 = vmatprep.mubr.f32.mxu0 0.0
    %613 = vmatmul.mubr.f32.gmra.mrb[0].mxu0 %v163
    %v614 = vpop.f32.mrb[0].mxu0
    %v615 = vadd.f32 0.0, %v614
    %v616 = vpop.f32.mrb[0].mxu0
    %617 = vmatprep.mubr.f32.mxu0 0.0
    %618 = vmatmul.mubr.f32.gmra.mrb[0].mxu0 %v166
    %v619 = vpop.f32.mrb[0].mxu0
    %v620 = vadd.f32 0.0, %v619
    %v621 = vpop.f32.mrb[0].mxu0
    %622 = vmatprep.mubr.f32.mxu0 0.0
    %623 = vmatmul.mubr.f32.gmra.mrb[0].mxu0 %v169
    %v624 = vpop.f32.mrb[0].mxu0
    %v625 = vadd.f32 0.0, %v624
    %v626 = vpop.f32.mrb[0].mxu0
    %627 = vmatprep.mubr.f32.mxu0 0.0
    %628 = vmatmul.mubr.f32.gmra.mrb[0].mxu0 %v172
    %v629 = vpop.f32.mrb[0].mxu0
    %v630 = vadd.f32 0.0, %v629
    %v631 = vpop.f32.mrb[0].mxu0
    %632 = vdwg.mxu0
    %v634 = vsel %vm161, %v615, 0
    %v637 = vsel %vm161, %v620, 0
    %v640 = vsel %vm161, %v625, 0
    %v643 = vsel %vm161, %v630, 0
    %645 = vmatprep.subr.mxu0 0.0
    %646 = vmatpush1.msra.mxu0 %v159
    %647 = vmatprep.subr.mxu0 0.0
    %648 = vmatpush1.msra.mxu0 %v160
    %649 = vmatprep.subr.mxu0 0.0
    %650 = vmatpush1.msra.mxu0 0.0
    %651 = vmatprep.subr.mxu0 0.0
    %652 = vmatpush1.msra.mxu0 0.0
    %653 = vmatprep.subr.mxu0 0.0
    %654 = vmatpush1.msra.mxu0 0.0
    %655 = vmatprep.subr.mxu0 0.0
    %656 = vmatpush1.msra.mxu0 0.0
    %657 = vmatprep.subr.mxu0 0.0
    %658 = vmatpush1.msra.mxu0 0.0
    %659 = vmatprep.subr.mxu0 0.0
    %660 = vmatpush1.msra.mxu0 0.0
    %661 = vmatprep.subr.mxu0 0.0
    %662 = vmatpush1.msra.mxu0 0.0
    %663 = vmatprep.subr.mxu0 0.0
    %664 = vmatpush1.msra.mxu0 0.0
    %665 = vmatprep.subr.mxu0 0.0
    %666 = vmatpush1.msra.mxu0 0.0
    %667 = vmatprep.subr.mxu0 0.0
    %668 = vmatpush1.msra.mxu0 0.0
    %669 = vmatprep.subr.mxu0 0.0
    %670 = vmatpush1.msra.mxu0 0.0
    %671 = vmatprep.subr.mxu0 0.0
    %672 = vmatpush1.msra.mxu0 0.0
    %673 = vmatprep.subr.mxu0 0.0
    %674 = vmatpush1.msra.mxu0 0.0
    %675 = vmatprep.subr.mxu0 0.0
    %676 = vmatpush1.msra.mxu0 0.0
    %677 = vmatprep.subr.mxu0 0.0
    %678 = vmatpush1.msra.mxu0 0.0
    %679 = vmatprep.subr.mxu0 0.0
    %680 = vmatpush1.msra.mxu0 0.0
    %681 = vmatprep.subr.mxu0 0.0
    %682 = vmatpush1.msra.mxu0 0.0
    %683 = vmatprep.subr.mxu0 0.0
    %684 = vmatpush1.msra.mxu0 0.0
    %685 = vmatprep.subr.mxu0 0.0
    %686 = vmatpush1.msra.mxu0 0.0
    %687 = vmatprep.subr.mxu0 0.0
    %688 = vmatpush1.msra.mxu0 0.0
    %689 = vmatprep.subr.mxu0 0.0
    %690 = vmatpush1.msra.mxu0 0.0
    %691 = vmatprep.subr.mxu0 0.0
    %692 = vmatpush1.msra.mxu0 0.0
    %693 = vmatprep.subr.mxu0 0.0
    %694 = vmatpush1.msra.mxu0 0.0
    %695 = vmatprep.subr.mxu0 0.0
    %696 = vmatpush1.msra.mxu0 0.0
    %697 = vmatprep.subr.mxu0 0.0
    %698 = vmatpush1.msra.mxu0 0.0
    %699 = vmatprep.subr.mxu0 0.0
    %700 = vmatpush1.msra.mxu0 0.0
    %701 = vmatprep.subr.mxu0 0.0
    %702 = vmatpush1.msra.mxu0 0.0
    %703 = vmatprep.subr.mxu0 0.0
    %704 = vmatpush1.msra.mxu0 0.0
    %705 = vmatprep.subr.mxu0 0.0
    %706 = vmatpush1.msra.mxu0 0.0
    %707 = vmatprep.subr.mxu0 0.0
    %708 = vmatpush1.msra.mxu0 0.0
    %709 = vmatprep.mubr.f32.mxu0 0.0
    %710 = vmatmul.mubr.f32.gmra.mrb[0].mxu0 %v634
    %v711 = vpop.f32.mrb[0].mxu0
    %v712 = vadd.f32 0.0, %v711
    %v713 = vpop.f32.mrb[0].mxu0
    %714 = vmatprep.mubr.f32.mxu0 0.0
    %715 = vmatmul.mubr.f32.gmra.mrb[0].mxu0 %v637
    %v716 = vpop.f32.mrb[0].mxu0
    %v717 = vadd.f32 0.0, %v716
    %v718 = vpop.f32.mrb[0].mxu0
    %719 = vmatprep.mubr.f32.mxu0 0.0
    %720 = vmatmul.mubr.f32.gmra.mrb[0].mxu0 %v640
    %v721 = vpop.f32.mrb[0].mxu0
    %v722 = vadd.f32 0.0, %v721
    %v723 = vpop.f32.mrb[0].mxu0
    %724 = vmatprep.mubr.f32.mxu0 0.0
    %725 = vmatmul.mubr.f32.gmra.mrb[0].mxu0 %v643
    %v726 = vpop.f32.mrb[0].mxu0
    %v727 = vadd.f32 0.0, %v726
    %v728 = vpop.f32.mrb[0].mxu0
    %729 = vdwg.mxu0
    %s730 = scalar_lea.vmem [#allocation3], 64
    %731 = vst.msk [vmem:[%s730] sm:$0xff] %vm356, %v712
    %732 = vst.msk [vmem:[%s730 + $0x8] sm:$0xff] %vm356, %v717
    %733 = vst.msk [vmem:[%s730 + $0x10] sm:$0xff] %vm356, %v722
    %734 = vst.msk [vmem:[%s730 + $0x18] sm:$0xff] %vm356, %v727
    %735 = vmatprep.subr.mxu0 0.0
    %736 = vmatpush1.msra.mxu0 %v153
    %737 = vmatprep.subr.mxu0 0.0
    %738 = vmatpush1.msra.mxu0 %v154
    %739 = vmatprep.subr.mxu0 0.0
    %740 = vmatpush1.msra.mxu0 0.0
    %741 = vmatprep.subr.mxu0 0.0
    %742 = vmatpush1.msra.mxu0 0.0
    %743 = vmatprep.subr.mxu0 0.0
    %744 = vmatpush1.msra.mxu0 0.0
    %745 = vmatprep.subr.mxu0 0.0
    %746 = vmatpush1.msra.mxu0 0.0
    %747 = vmatprep.subr.mxu0 0.0
    %748 = vmatpush1.msra.mxu0 0.0
    %749 = vmatprep.subr.mxu0 0.0
    %750 = vmatpush1.msra.mxu0 0.0
    %751 = vmatprep.subr.mxu0 0.0
    %752 = vmatpush1.msra.mxu0 0.0
    %753 = vmatprep.subr.mxu0 0.0
    %754 = vmatpush1.msra.mxu0 0.0
    %755 = vmatprep.subr.mxu0 0.0
    %756 = vmatpush1.msra.mxu0 0.0
    %757 = vmatprep.subr.mxu0 0.0
    %758 = vmatpush1.msra.mxu0 0.0
    %759 = vmatprep.subr.mxu0 0.0
    %760 = vmatpush1.msra.mxu0 0.0
    %761 = vmatprep.subr.mxu0 0.0
    %762 = vmatpush1.msra.mxu0 0.0
    %763 = vmatprep.subr.mxu0 0.0
    %764 = vmatpush1.msra.mxu0 0.0
    %765 = vmatprep.subr.mxu0 0.0
    %766 = vmatpush1.msra.mxu0 0.0
    %767 = vmatprep.subr.mxu0 0.0
    %768 = vmatpush1.msra.mxu0 0.0
    %769 = vmatprep.subr.mxu0 0.0
    %770 = vmatpush1.msra.mxu0 0.0
    %771 = vmatprep.subr.mxu0 0.0
    %772 = vmatpush1.msra.mxu0 0.0
    %773 = vmatprep.subr.mxu0 0.0
    %774 = vmatpush1.msra.mxu0 0.0
    %775 = vmatprep.subr.mxu0 0.0
    %776 = vmatpush1.msra.mxu0 0.0
    %777 = vmatprep.subr.mxu0 0.0
    %778 = vmatpush1.msra.mxu0 0.0
    %779 = vmatprep.subr.mxu0 0.0
    %780 = vmatpush1.msra.mxu0 0.0
    %781 = vmatprep.subr.mxu0 0.0
    %782 = vmatpush1.msra.mxu0 0.0
    %783 = vmatprep.subr.mxu0 0.0
    %784 = vmatpush1.msra.mxu0 0.0
    %785 = vmatprep.subr.mxu0 0.0
    %786 = vmatpush1.msra.mxu0 0.0
    %787 = vmatprep.subr.mxu0 0.0
    %788 = vmatpush1.msra.mxu0 0.0
    %789 = vmatprep.subr.mxu0 0.0
    %790 = vmatpush1.msra.mxu0 0.0
    %791 = vmatprep.subr.mxu0 0.0
    %792 = vmatpush1.msra.mxu0 0.0
    %793 = vmatprep.subr.mxu0 0.0
    %794 = vmatpush1.msra.mxu0 0.0
    %795 = vmatprep.subr.mxu0 0.0
    %796 = vmatpush1.msra.mxu0 0.0
    %797 = vmatprep.subr.mxu0 0.0
    %798 = vmatpush1.msra.mxu0 0.0
    %799 = vmatprep.mubr.f32.mxu0 0.0
    %800 = vmatmul.mubr.f32.gmra.mrb[0].mxu0 %v163
    %v801 = vpop.f32.mrb[0].mxu0
    %v802 = vadd.f32 0.0, %v801
    %v803 = vpop.f32.mrb[0].mxu0
    %804 = vmatprep.mubr.f32.mxu0 0.0
    %805 = vmatmul.mubr.f32.gmra.mrb[0].mxu0 %v166
    %v806 = vpop.f32.mrb[0].mxu0
    %v807 = vadd.f32 0.0, %v806
    %v808 = vpop.f32.mrb[0].mxu0
    %809 = vmatprep.mubr.f32.mxu0 0.0
    %810 = vmatmul.mubr.f32.gmra.mrb[0].mxu0 %v169
    %v811 = vpop.f32.mrb[0].mxu0
    %v812 = vadd.f32 0.0, %v811
    %v813 = vpop.f32.mrb[0].mxu0
    %814 = vmatprep.mubr.f32.mxu0 0.0
    %815 = vmatmul.mubr.f32.gmra.mrb[0].mxu0 %v172
    %v816 = vpop.f32.mrb[0].mxu0
    %v817 = vadd.f32 0.0, %v816
    %v818 = vpop.f32.mrb[0].mxu0
    %819 = vdwg.mxu0
    %v821 = vsel %vm161, %v802, 0
    %v824 = vsel %vm161, %v807, 0
    %v827 = vsel %vm161, %v812, 0
    %v830 = vsel %vm161, %v817, 0
    %832 = vmatprep.subr.mxu0 0.0
    %833 = vmatpush1.msra.mxu0 %v159
    %834 = vmatprep.subr.mxu0 0.0
    %835 = vmatpush1.msra.mxu0 %v160
    %836 = vmatprep.subr.mxu0 0.0
    %837 = vmatpush1.msra.mxu0 0.0
    %838 = vmatprep.subr.mxu0 0.0
    %839 = vmatpush1.msra.mxu0 0.0
    %840 = vmatprep.subr.mxu0 0.0
    %841 = vmatpush1.msra.mxu0 0.0
    %842 = vmatprep.subr.mxu0 0.0
    %843 = vmatpush1.msra.mxu0 0.0
    %844 = vmatprep.subr.mxu0 0.0
    %845 = vmatpush1.msra.mxu0 0.0
    %846 = vmatprep.subr.mxu0 0.0
    %847 = vmatpush1.msra.mxu0 0.0
    %848 = vmatprep.subr.mxu0 0.0
    %849 = vmatpush1.msra.mxu0 0.0
    %850 = vmatprep.subr.mxu0 0.0
    %851 = vmatpush1.msra.mxu0 0.0
    %852 = vmatprep.subr.mxu0 0.0
    %853 = vmatpush1.msra.mxu0 0.0
    %854 = vmatprep.subr.mxu0 0.0
    %855 = vmatpush1.msra.mxu0 0.0
    %856 = vmatprep.subr.mxu0 0.0
    %857 = vmatpush1.msra.mxu0 0.0
    %858 = vmatprep.subr.mxu0 0.0
    %859 = vmatpush1.msra.mxu0 0.0
    %860 = vmatprep.subr.mxu0 0.0
    %861 = vmatpush1.msra.mxu0 0.0
    %862 = vmatprep.subr.mxu0 0.0
    %863 = vmatpush1.msra.mxu0 0.0
    %864 = vmatprep.subr.mxu0 0.0
    %865 = vmatpush1.msra.mxu0 0.0
    %866 = vmatprep.subr.mxu0 0.0
    %867 = vmatpush1.msra.mxu0 0.0
    %868 = vmatprep.subr.mxu0 0.0
    %869 = vmatpush1.msra.mxu0 0.0
    %870 = vmatprep.subr.mxu0 0.0
    %871 = vmatpush1.msra.mxu0 0.0
    %872 = vmatprep.subr.mxu0 0.0
    %873 = vmatpush1.msra.mxu0 0.0
    %874 = vmatprep.subr.mxu0 0.0
    %875 = vmatpush1.msra.mxu0 0.0
    %876 = vmatprep.subr.mxu0 0.0
    %877 = vmatpush1.msra.mxu0 0.0
    %878 = vmatprep.subr.mxu0 0.0
    %879 = vmatpush1.msra.mxu0 0.0
    %880 = vmatprep.subr.mxu0 0.0
    %881 = vmatpush1.msra.mxu0 0.0
    %882 = vmatprep.subr.mxu0 0.0
    %883 = vmatpush1.msra.mxu0 0.0
    %884 = vmatprep.subr.mxu0 0.0
    %885 = vmatpush1.msra.mxu0 0.0
    %886 = vmatprep.subr.mxu0 0.0
    %887 = vmatpush1.msra.mxu0 0.0
    %888 = vmatprep.subr.mxu0 0.0
    %889 = vmatpush1.msra.mxu0 0.0
    %890 = vmatprep.subr.mxu0 0.0
    %891 = vmatpush1.msra.mxu0 0.0
    %892 = vmatprep.subr.mxu0 0.0
    %893 = vmatpush1.msra.mxu0 0.0
    %894 = vmatprep.subr.mxu0 0.0
    %895 = vmatpush1.msra.mxu0 0.0
    %896 = vmatprep.mubr.f32.mxu0 0.0
    %897 = vmatmul.mubr.f32.gmra.mrb[0].mxu0 %v821
    %v898 = vpop.f32.mrb[0].mxu0
    %v899 = vadd.f32 0.0, %v898
    %v900 = vpop.f32.mrb[0].mxu0
    %901 = vmatprep.mubr.f32.mxu0 0.0
    %902 = vmatmul.mubr.f32.gmra.mrb[0].mxu0 %v824
    %v903 = vpop.f32.mrb[0].mxu0
    %v904 = vadd.f32 0.0, %v903
    %v905 = vpop.f32.mrb[0].mxu0
    %906 = vmatprep.mubr.f32.mxu0 0.0
    %907 = vmatmul.mubr.f32.gmra.mrb[0].mxu0 %v827
    %v908 = vpop.f32.mrb[0].mxu0
    %v909 = vadd.f32 0.0, %v908
    %v910 = vpop.f32.mrb[0].mxu0
    %911 = vmatprep.mubr.f32.mxu0 0.0
    %912 = vmatmul.mubr.f32.gmra.mrb[0].mxu0 %v830
    %v913 = vpop.f32.mrb[0].mxu0
    %v914 = vadd.f32 0.0, %v913
    %v915 = vpop.f32.mrb[0].mxu0
    %916 = vdwg.mxu0
    %s917 = scalar_lea.vmem [#allocation3], 96
    %918 = vst.msk [vmem:[%s917] sm:$0xff] %vm356, %v899
    %919 = vst.msk [vmem:[%s917 + $0x8] sm:$0xff] %vm356, %v904
    %920 = vst.msk [vmem:[%s917 + $0x10] sm:$0xff] %vm356, %v909
    %921 = vst.msk [vmem:[%s917 + $0x18] sm:$0xff] %vm356, %v914
    // Predicated region
    $region26: #{upsample_forward.3} parent=1 // pred_check
      _
    $region27: #{upsample_forward.3} parent=1 // pred_check_branch
      %923 = sbr.rel (0) target = $region29
    $region28: #{upsample_forward.3} parent=1 // pred_region
      %s925 = ssub.s32 2048, 2048
      %926 = vsyncadd [#allocation4], %s925
      %s927 = sshll.u32 [#allocation3], 4
      %s928 = int_to_ptr.vmem [resolvable:$true] %s927
      %933 = dma.vmem_to_hbm [thread:$0]  %s928, 2048, %s6, [#allocation4], 128, 128, 8
    $region29: #{upsample_forward.3} parent=1 // pred_fallthru
      _
    // Predicated region
    $region30: #{upsample_forward.3} parent=1 // pred_check
      _
    $region31: #{upsample_forward.3} parent=1 // pred_check_branch
      %935 = sbr.rel (0) target = $region33
    $region32: #{upsample_forward.3} parent=1 // pred_region
      %936 = dma.done [#allocation4], 2048
    $region33: #{upsample_forward.3} parent=1 // pred_fallthru
      _
    %937 = vsyncpa [#allocation4], 1

</llo_original>
